<compile_context>
chip_gen: v5e
topology: v5e:2x2
jax: 0.10.0
libtpu: 0.0.40
codegen_flags: <defaults>
</compile_context>

<pallas_src>
import functools
import math

import jax
import jax.numpy as jnp
from jax.experimental import pallas as pl
from jax.experimental.pallas import tpu as pltpu


def _round_up(x, m):
    return ((x + m - 1) // m) * m


def compute_conv_output_size(Lin, kernel_size, stride=1, padding=0, dilation=1):
    return int((Lin + 2 * padding - dilation * (kernel_size - 1) - 1) // stride + 1)


def _pick_tb(n_img, img_lanes, lane_budget=4096):
    """Images per grid step: TB | N, TB*R <= budget, prefer >=2 grid blocks."""
    divs = [d for d in range(1, n_img + 1)
            if n_img % d == 0 and d * img_lanes <= lane_budget]
    if not divs:
        return 1
    if n_img >= 2:
        two_plus = [d for d in divs if n_img // d >= 2]
        if two_plus:
            return max(two_plus)
    return max(divs)


# ----------------------------------------------------------------------------
# Pallas kernels
# ----------------------------------------------------------------------------
def _conv_epilogue(acc, b_ref, o_ref, row_stride, do_pool):
    """bias + ReLU (+ fused 2x2/stride-2 max-pool) on the f32 accumulator."""
    L = acc.shape[-1]
    acc = jnp.maximum(acc + b_ref[...], 0.0)
    if do_pool:
        # max over {r, r+1, r+W, r+W+1}; valid pooled values land on the
        # even (row, col) grid positions, compacted later in XLA.
        acc = jnp.maximum(acc, pltpu.roll(acc, L - row_stride, axis=1))
        acc = jnp.maximum(acc, pltpu.roll(acc, L - 1, axis=1))
    o_ref[...] = acc.astype(o_ref.dtype)


def _conv3x3_kernel(x_ref, w_ref, b_ref, o_ref, stk_ref, *, cin, row_stride,
                    do_pool):
    """Fused 3x3 valid conv (+bias+ReLU[+pool]) as ONE K=9*Cin MXU matmul.

    x_ref : (Cin, L)        bf16 activations, L = TB * Hp*Wp (lane-dense)
    w_ref : (Cout, 9*Cin)   bf16, column index = tap*Cin + cin
    b_ref : (Cout, 1)       f32
    o_ref : (Cout, L)       bf16
    stk_ref: (9*Cin, L)     bf16 VMEM scratch -- stacked, input-rolled RHS
    """
    L = x_ref.shape[-1]
    # Single upcast, hoisted out of the tap loop.  Rolls are done in f32
    # (the proven-to-lower roll dtype); the f32->bf16 roundtrip is exact for
    # bf16-valued data and the per-tap downcast fuses with the scratch store.
    x = x_ref[...].astype(jnp.float32)                       # (Cin, L)
    for t in range(9):
        ky, kx = divmod(t, 3)
        shift = ky * row_stride + kx
        xt = pltpu.roll(x, L - shift, axis=1) if shift else x
        stk_ref[t * cin:(t + 1) * cin, :] = xt.astype(stk_ref.dtype)
    acc = jnp.dot(w_ref[...], stk_ref[...],
                  preferred_element_type=jnp.float32)        # (Cout, L) f32
    _conv_epilogue(acc, b_ref, o_ref, row_stride, do_pool)


def _conv3x3_small_cin_kernel(x_ref, w_ref, b_ref, o_ref, *, cin, row_stride,
                              do_pool):
    """Cin < 8 path (conv1): f32 VPU broadcast-multiply, input-side rolls."""
    L = x_ref.shape[-1]
    x = x_ref[...].astype(jnp.float32)                       # (cin, L)
    w = w_ref[...]                                           # (Cout, 9*cin) f32
    acc = None
    for t in range(9):
        ky, kx = divmod(t, 3)
        shift = ky * row_stride + kx
        xt = pltpu.roll(x, L - shift, axis=1) if shift else x
        for c in range(cin):
            col = t * cin + c
            ys = w[:, col:col + 1] * xt[c:c + 1, :]          # (Cout,1)*(1,L)
            acc = ys if acc is None else acc + ys
    _conv_epilogue(acc, b_ref, o_ref, row_stride, do_pool)


def _heads_kernel(x_ref, w_ref, b_ref, o_ref):
    o_ref[...] = (jnp.dot(x_ref[...], w_ref[...],
                          preferred_element_type=jnp.float32)
                  + b_ref[...]).astype(o_ref.dtype)


# ----------------------------------------------------------------------------
# Wrappers
# ----------------------------------------------------------------------------
def conv3x3_layer(x, w_packed, b, *, n_img, row_stride, do_pool,
                  consumed_max_rc, lane_budget=4096, out_dtype=jnp.bfloat16):
    """x: (Cin, N*R) with R = Hp*Wp, R % 128 == 0.  Output: (Cout, N*R)."""
    cin_x, Ltot = x.shape
    cout, k9 = w_packed.shape
    cin = k9 // 9
    assert cin == cin_x and k9 == 9 * cin
    assert Ltot % n_img == 0
    R = Ltot // n_img
    assert R % 128 == 0 and R % row_stride == 0

    # Roll-wrap safety: the deepest lane any *consumed* output of this layer
    # reads (its own 3x3 taps, plus the fused pool's +W+1 if pooled) must
    # stay inside the per-image frame of R lanes; otherwise a roll would
    # bleed the next image's data into a consumed position.
    max_r, max_c = consumed_max_rc
    max_shift = 2 * row_stride + 2 + ((row_stride + 1) if do_pool else 0)
    assert max_r * row_stride + max_c + max_shift <= R - 1, (
        "per-image trailing padding too small for the roll-based conv",
        max_r, max_c, row_stride, R)

    tb = _pick_tb(n_img, R, lane_budget)
    L = tb * R
    grid = (Ltot // L,)

    out_itemsize = jnp.dtype(out_dtype).itemsize
    flops = 2 * 9 * cout * cin * Ltot
    bytes_accessed = (x.size * x.dtype.itemsize
                      + cout * Ltot * out_itemsize
                      + w_packed.size * w_packed.dtype.itemsize
                      + b.size * b.dtype.itemsize)

    common = dict(
        out_shape=jax.ShapeDtypeStruct((cout, Ltot), out_dtype),
        grid=grid,
        in_specs=[
            pl.BlockSpec((cin, L), lambda i: (0, i)),
            pl.BlockSpec((cout, k9), lambda i: (0, 0)),
            pl.BlockSpec((cout, 1), lambda i: (0, 0)),
        ],
        out_specs=pl.BlockSpec((cout, L), lambda i: (0, i)),
        compiler_params=pltpu.CompilerParams(
            dimension_semantics=("parallel",),
            vmem_limit_bytes=32 * 1024 * 1024),
        cost_estimate=pl.CostEstimate(flops=flops, transcendentals=0,
                                      bytes_accessed=bytes_accessed),
    )

    if cin < 8:
        kernel = functools.partial(_conv3x3_small_cin_kernel, cin=cin,
                                   row_stride=row_stride, do_pool=do_pool)
        return pl.pallas_call(kernel, **common)(x, w_packed, b)

    kernel = functools.partial(_conv3x3_kernel, cin=cin,
                               row_stride=row_stride, do_pool=do_pool)
    return pl.pallas_call(
        kernel,
        scratch_shapes=[pltpu.VMEM((9 * cin, L), jnp.bfloat16)],
        **common,
    )(x, w_packed, b)


def fused_heads(feat, w, b):
    """All task heads in one lane-dense matmul.  feat:(N,F) bf16, w:(F,Npad)."""
    N, F = feat.shape
    Npad = w.shape[1]
    return pl.pallas_call(
        _heads_kernel,
        out_shape=jax.ShapeDtypeStruct((N, Npad), jnp.float32),
        grid=(1,),
        in_specs=[
            pl.BlockSpec((N, F), lambda i: (0, 0)),
            pl.BlockSpec((F, Npad), lambda i: (0, 0)),
            pl.BlockSpec((1, Npad), lambda i: (0, 0)),
        ],
        out_specs=pl.BlockSpec((N, Npad), lambda i: (0, 0)),
        compiler_params=pltpu.CompilerParams(
            dimension_semantics=("arbitrary",)),
    )(feat, w, b)


# ----------------------------------------------------------------------------
# Network (parameters + forward)
# ----------------------------------------------------------------------------
def init_params(key, *, ncha, size, taskcla, nfeat=64):
    # mirror the PyTorch feature-size computation
    s = compute_conv_output_size(size, 3)
    s = compute_conv_output_size(s, 3)
    s = s // 2
    s = compute_conv_output_size(s, 3)
    s = compute_conv_output_size(s, 3)
    s = s // 2
    feat = s * s * nfeat

    keys = jax.random.split(key, 9)

    def conv_layer(kw, kb, cin, cout):
        w = (1.0 / math.sqrt(cin * 9)) * jax.random.normal(
            kw, (cout, cin, 3, 3), jnp.float32)               # OIHW (reference)
        b = 0.01 * jax.random.normal(kb, (cout, 1), jnp.float32)
        # lane-dense packed layout for the kernel: column = tap*Cin + cin
        packed = w.transpose(0, 2, 3, 1).reshape(cout, 9 * cin)
        if cin >= 8:                      # bf16 MXU operands for the big layers
            packed = packed.astype(jnp.bfloat16)
        return w, packed, b

    params = {}
    cins = [ncha, nfeat, nfeat, nfeat]
    for li in range(4):
        w, pk, b = conv_layer(keys[2 * li], keys[2 * li + 1], cins[li], nfeat)
        params[f"w{li + 1}_oihw"] = w
        params[f"w{li + 1}"] = pk
        params[f"b{li + 1}"] = b

    # fused task heads: rows in PyTorch (c,h,w) feature order; output columns
    # padded to a multiple of 128 so the kernel's stores are lane-dense.
    hkeys = jax.random.split(keys[8], 2 * len(taskcla))
    ws, bs = [], []
    for i, (_, n) in enumerate(taskcla):
        scale = 1.0 / math.sqrt(feat)
        ws.append(scale * jax.random.normal(hkeys[2 * i], (feat, n), jnp.float32))
        bs.append(0.01 * jax.random.normal(hkeys[2 * i + 1], (n,), jnp.float32))
    hw = jnp.concatenate(ws, axis=1)
    hb = jnp.concatenate(bs, axis=0).reshape(1, -1)
    ntot = hw.shape[1]
    npad = _round_up(ntot, 128)
    params["head_w_f32"] = hw
    params["head_b_f32"] = hb
    params["head_w"] = jnp.pad(hw, ((0, 0), (0, npad - ntot))).astype(jnp.bfloat16)
    params["head_b"] = jnp.pad(hb, ((0, 0), (0, npad - ntot)))
    params["head_sizes"] = [n for _, n in taskcla]
    params["feat"] = feat
    params["s"] = s
    return params


def net_forward(params, x_nchw):
    """Eval-mode forward (sample=False). Returns list of per-task logits."""
    x = x_nchw.astype(jnp.float32)
    N, C0, H0, W0 = x.shape
    cout = params["w1"].shape[0]

    # ---- stage 1: conv1 -> conv2 (+fused ReLU / 2x2 max-pool) --------------
    Hp1, Wp1 = _round_up(H0, 8), _round_up(W0, 16)
    R1 = Hp1 * Wp1
    h = jnp.pad(x, ((0, 0), (0, 0), (0, Hp1 - H0), (0, Wp1 - W0)))
    h = jnp.transpose(h, (1, 0, 2, 3)).reshape(C0, N * R1)     # (C0, N*R1) f32

    Hq1, Wq1 = (H0 - 4) // 2, (W0 - 4) // 2                    # pooled grid
    h = conv3x3_layer(h, params["w1"], params["b1"], n_img=N, row_stride=Wp1,
                      do_pool=False,
                      consumed_max_rc=(2 * Hq1 + 1, 2 * Wq1 + 1))
    h = conv3x3_layer(h, params["w2"], params["b2"], n_img=N, row_stride=Wp1,
                      do_pool=True,
                      consumed_max_rc=(2 * Hq1 - 2, 2 * Wq1 - 2))

    # compact pooled even grid -> zero-padded stage-2 grid (one fused XLA pass)
    Hp2, Wp2 = _round_up(Hq1, 8), _round_up(Wq1, 16)
    R2 = Hp2 * Wp2
    h = h.reshape(cout, N, Hp1, Wp1)[:, :, 0:2 * Hq1:2, 0:2 * Wq1:2]
    h = jnp.pad(h, ((0, 0), (0, 0), (0, Hp2 - Hq1), (0, Wp2 - Wq1)))
    h = h.reshape(cout, N * R2)                                # bf16

    # ---- stage 2: conv3 -> conv4 (+fused ReLU / 2x2 max-pool) --------------
    Hq2, Wq2 = (Hq1 - 4) // 2, (Wq1 - 4) // 2
    h = conv3x3_layer(h, params["w3"], params["b3"], n_img=N, row_stride=Wp2,
                      do_pool=False,
                      consumed_max_rc=(2 * Hq2 + 1, 2 * Wq2 + 1))
    h = conv3x3_layer(h, params["w4"], params["b4"], n_img=N, row_stride=Wp2,
                      do_pool=True,
                      consumed_max_rc=(2 * Hq2 - 2, 2 * Wq2 - 2))

    # ---- flatten in PyTorch h.view(B,-1) (c,h,w) order + fused heads -------
    h = h.reshape(cout, N, Hp2, Wp2)[:, :, 0:2 * Hq2:2, 0:2 * Wq2:2]
    feat = jnp.transpose(h, (1, 0, 2, 3)).reshape(N, cout * Hq2 * Wq2)  # bf16
    assert feat.shape[1] == params["head_w"].shape[0]

    logits = fused_heads(feat, params["head_w"], params["head_b"])      # f32
    outs, off = [], 0
    for n_cls in params["head_sizes"]:
        outs.append(logits[:, off:off + n_cls])
        off += n_cls
    # TODO(synk): train-time BayesianConv2D weight sampling and the
    # DropoutConv2d / DropoutLinear variational-dropout KL terms are not
    # implemented (those classes are not provided); eval mode reduces to the
    # deterministic path above.
    return outs


# ----------------------------------------------------------------------------
# Pure-XLA f32 reference of the same eval-mode forward (numeric self-check)
# ----------------------------------------------------------------------------
def net_forward_reference(params, x_nchw):
    x = x_nchw.astype(jnp.float32)

    def conv(h, w_oihw, b):
        y = jax.lax.conv_general_dilated(
            h, w_oihw, window_strides=(1, 1), padding="VALID",
            dimension_numbers=("NCHW", "OIHW", "NCHW"),
            precision=jax.lax.Precision.HIGHEST)
        return jax.nn.relu(y + b.reshape(1, -1, 1, 1))

    def pool(h):
        n, c, H, W = h.shape
        h = h[:, :, :2 * (H // 2), :2 * (W // 2)]
        return h.reshape(n, c, H // 2, 2, W // 2, 2).max(axis=(3, 5))

    h = conv(x, params["w1_oihw"], params["b1"])
    h = pool(conv(h, params["w2_oihw"], params["b2"]))
    h = conv(h, params["w3_oihw"], params["b3"])
    h = pool(conv(h, params["w4_oihw"], params["b4"]))
    feat = h.reshape(h.shape[0], -1)
    logits = (jnp.dot(feat, params["head_w_f32"],
                      precision=jax.lax.Precision.HIGHEST)
              + params["head_b_f32"])
    outs, off = [], 0
    for n_cls in params["head_sizes"]:
        outs.append(logits[:, off:off + n_cls])
        off += n_cls
    return outs


# ----------------------------------------------------------------------------
if __name__ == "__main__":
    key = jax.random.PRNGKey(0)

    # Omniglot-style input: (ncha=1, 28, 28); batch=2; 2 tasks, 5 classes each.
    ncha, size = 1, 28
    taskcla = [(0, 5), (1, 5)]
    batch = 2

    pkey, xkey = jax.random.split(key)
    params = init_params(pkey, ncha=ncha, size=size, taskcla=taskcla)
    x = jax.random.normal(xkey, (batch, ncha, size, size), jnp.float32)

    ys = net_forward(params, x)
    ys = [jax.block_until_ready(y) for y in ys]

    # sanity: two heads, each (batch, n_classes), finite values
    assert len(ys) == len(taskcla)
    for (t, n), y in zip(taskcla, ys):
        assert y.shape == (batch, n), y.shape
        assert bool(jnp.all(jnp.isfinite(y)))

    # numeric check against the pure-XLA f32 reference (bf16 MXU path in the
    # kernels -> tolerance a few 1e-2 of the logit scale)
    ys_ref = net_forward_reference(params, x)
    for y, yr in zip(ys, ys_ref):
        err = float(jnp.max(jnp.abs(y - yr)))
        scale = 1.0 + float(jnp.max(jnp.abs(yr)))
        assert err <= 0.04 * scale, (err, scale)

    print("KERNEL_OK")
</pallas_src>

<mosaic_0001>
module attributes {stable_mosaic.version = 11 : i64} {
  func.func @_conv3x3_small_cin_kernel(%arg0: i32, %arg1: memref<1x1024xf32, #tpu.memory_space<vmem>>, %arg2: memref<64x9xf32, #tpu.memory_space<vmem>>, %arg3: memref<64x1xf32, #tpu.memory_space<vmem>>, %arg4: memref<64x1024xbf16, #tpu.memory_space<vmem>>) attributes {dimension_semantics = [#tpu.dimension_semantics<parallel>], iteration_bounds = array<i64: 2>, scalar_prefetch = 0 : i64, scratch_operands = 0 : i64, tpu.core_type = #tpu.core_type<tc>, window_params = [{transform_indices = @transform_0, window_bounds = array<i64: 1, 1024>}, {pipeline_mode = #tpu.pipeline_mode<synchronous>, transform_indices = @transform_1, window_bounds = array<i64: 64, 9>}, {pipeline_mode = #tpu.pipeline_mode<synchronous>, transform_indices = @transform_2, window_bounds = array<i64: 64, 1>}, {transform_indices = @transform_3, window_bounds = array<i64: 64, 1024>}]} {
    %c0 = arith.constant 0 : index
    %c0_0 = arith.constant 0 : index
    %0 = vector.load %arg1[%c0, %c0_0] : memref<1x1024xf32, #tpu.memory_space<vmem>>, vector<1x1024xf32>
    %c0_1 = arith.constant 0 : index
    %c0_2 = arith.constant 0 : index
    %1 = vector.load %arg2[%c0_1, %c0_2] : memref<64x9xf32, #tpu.memory_space<vmem>>, vector<64x9xf32>
    %2 = vector.extract_strided_slice %1 {offsets = [0, 0], sizes = [64, 1], strides = [1, 1]} : vector<64x9xf32> to vector<64x1xf32>
    %3 = vector.broadcast %2 : vector<64x1xf32> to vector<64x1024xf32>
    %4 = vector.broadcast %0 : vector<1x1024xf32> to vector<64x1024xf32>
    %5 = arith.mulf %3, %4 : vector<64x1024xf32>
    %c1023_i32 = arith.constant 1023 : i32
    %6 = tpu.dynamic_rotate %0 by %c1023_i32 dim 1 : vector<1x1024xf32>, i32 -> vector<1x1024xf32>
    %7 = vector.extract_strided_slice %1 {offsets = [0, 1], sizes = [64, 1], strides = [1, 1]} : vector<64x9xf32> to vector<64x1xf32>
    %8 = vector.broadcast %7 : vector<64x1xf32> to vector<64x1024xf32>
    %9 = vector.broadcast %6 : vector<1x1024xf32> to vector<64x1024xf32>
    %10 = arith.mulf %8, %9 : vector<64x1024xf32>
    %11 = arith.addf %5, %10 : vector<64x1024xf32>
    %c1022_i32 = arith.constant 1022 : i32
    %12 = tpu.dynamic_rotate %0 by %c1022_i32 dim 1 : vector<1x1024xf32>, i32 -> vector<1x1024xf32>
    %13 = vector.extract_strided_slice %1 {offsets = [0, 2], sizes = [64, 1], strides = [1, 1]} : vector<64x9xf32> to vector<64x1xf32>
    %14 = vector.broadcast %13 : vector<64x1xf32> to vector<64x1024xf32>
    %15 = vector.broadcast %12 : vector<1x1024xf32> to vector<64x1024xf32>
    %16 = arith.mulf %14, %15 : vector<64x1024xf32>
    %17 = arith.addf %11, %16 : vector<64x1024xf32>
    %c992_i32 = arith.constant 992 : i32
    %18 = tpu.dynamic_rotate %0 by %c992_i32 dim 1 : vector<1x1024xf32>, i32 -> vector<1x1024xf32>
    %19 = vector.extract_strided_slice %1 {offsets = [0, 3], sizes = [64, 1], strides = [1, 1]} : vector<64x9xf32> to vector<64x1xf32>
    %20 = vector.broadcast %19 : vector<64x1xf32> to vector<64x1024xf32>
    %21 = vector.broadcast %18 : vector<1x1024xf32> to vector<64x1024xf32>
    %22 = arith.mulf %20, %21 : vector<64x1024xf32>
    %23 = arith.addf %17, %22 : vector<64x1024xf32>
    %c991_i32 = arith.constant 991 : i32
    %24 = tpu.dynamic_rotate %0 by %c991_i32 dim 1 : vector<1x1024xf32>, i32 -> vector<1x1024xf32>
    %25 = vector.extract_strided_slice %1 {offsets = [0, 4], sizes = [64, 1], strides = [1, 1]} : vector<64x9xf32> to vector<64x1xf32>
    %26 = vector.broadcast %25 : vector<64x1xf32> to vector<64x1024xf32>
    %27 = vector.broadcast %24 : vector<1x1024xf32> to vector<64x1024xf32>
    %28 = arith.mulf %26, %27 : vector<64x1024xf32>
    %29 = arith.addf %23, %28 : vector<64x1024xf32>
    %c990_i32 = arith.constant 990 : i32
    %30 = tpu.dynamic_rotate %0 by %c990_i32 dim 1 : vector<1x1024xf32>, i32 -> vector<1x1024xf32>
    %31 = vector.extract_strided_slice %1 {offsets = [0, 5], sizes = [64, 1], strides = [1, 1]} : vector<64x9xf32> to vector<64x1xf32>
    %32 = vector.broadcast %31 : vector<64x1xf32> to vector<64x1024xf32>
    %33 = vector.broadcast %30 : vector<1x1024xf32> to vector<64x1024xf32>
    %34 = arith.mulf %32, %33 : vector<64x1024xf32>
    %35 = arith.addf %29, %34 : vector<64x1024xf32>
    %c960_i32 = arith.constant 960 : i32
    %36 = tpu.dynamic_rotate %0 by %c960_i32 dim 1 : vector<1x1024xf32>, i32 -> vector<1x1024xf32>
    %37 = vector.extract_strided_slice %1 {offsets = [0, 6], sizes = [64, 1], strides = [1, 1]} : vector<64x9xf32> to vector<64x1xf32>
    %38 = vector.broadcast %37 : vector<64x1xf32> to vector<64x1024xf32>
    %39 = vector.broadcast %36 : vector<1x1024xf32> to vector<64x1024xf32>
    %40 = arith.mulf %38, %39 : vector<64x1024xf32>
    %41 = arith.addf %35, %40 : vector<64x1024xf32>
    %c959_i32 = arith.constant 959 : i32
    %42 = tpu.dynamic_rotate %0 by %c959_i32 dim 1 : vector<1x1024xf32>, i32 -> vector<1x1024xf32>
    %43 = vector.extract_strided_slice %1 {offsets = [0, 7], sizes = [64, 1], strides = [1, 1]} : vector<64x9xf32> to vector<64x1xf32>
    %44 = vector.broadcast %43 : vector<64x1xf32> to vector<64x1024xf32>
    %45 = vector.broadcast %42 : vector<1x1024xf32> to vector<64x1024xf32>
    %46 = arith.mulf %44, %45 : vector<64x1024xf32>
    %47 = arith.addf %41, %46 : vector<64x1024xf32>
    %c958_i32 = arith.constant 958 : i32
    %48 = tpu.dynamic_rotate %0 by %c958_i32 dim 1 : vector<1x1024xf32>, i32 -> vector<1x1024xf32>
    %49 = vector.extract_strided_slice %1 {offsets = [0, 8], sizes = [64, 1], strides = [1, 1]} : vector<64x9xf32> to vector<64x1xf32>
    %50 = vector.broadcast %49 : vector<64x1xf32> to vector<64x1024xf32>
    %51 = vector.broadcast %48 : vector<1x1024xf32> to vector<64x1024xf32>
    %52 = arith.mulf %50, %51 : vector<64x1024xf32>
    %53 = arith.addf %47, %52 : vector<64x1024xf32>
    %c0_3 = arith.constant 0 : index
    %c0_4 = arith.constant 0 : index
    %54 = vector.load %arg3[%c0_3, %c0_4] : memref<64x1xf32, #tpu.memory_space<vmem>>, vector<64x1xf32>
    %55 = vector.broadcast %54 : vector<64x1xf32> to vector<64x1024xf32>
    %56 = arith.addf %53, %55 : vector<64x1024xf32>
    %cst = arith.constant 0.000000e+00 : f32
    %57 = vector.broadcast %cst : f32 to vector<64x1024xf32>
    %58 = arith.maximumf %56, %57 : vector<64x1024xf32>
    %59 = arith.truncf %58 : vector<64x1024xf32> to vector<64x1024xbf16>
    %c0_5 = arith.constant 0 : index
    %c0_6 = arith.constant 0 : index
    %60 = vector.load %arg4[%c0_5, %c0_6] : memref<64x1024xbf16, #tpu.memory_space<vmem>>, vector<64x1024xbf16>
    tpu.vector_store %arg4[%c0_5, %c0_6], %59 {strides = array<i32>} : memref<64x1024xbf16, #tpu.memory_space<vmem>>, vector<64x1024xbf16>,
    return
  }
  func.func @transform_0(%arg0: i32) -> (i32, i32) {
    %c0_i32 = arith.constant 0 : i32
    %c0_i32_0 = arith.constant 0 : i32
    return %c0_i32, %arg0 : i32, i32
  }
  func.func @transform_1(%arg0: i32) -> (i32, i32) {
    %c0_i32 = arith.constant 0 : i32
    %c0_i32_0 = arith.constant 0 : i32
    %c0_i32_1 = arith.constant 0 : i32
    return %c0_i32, %c0_i32_0 : i32, i32
  }
  func.func @transform_2(%arg0: i32) -> (i32, i32) {
    %c0_i32 = arith.constant 0 : i32
    %c0_i32_0 = arith.constant 0 : i32
    %c0_i32_1 = arith.constant 0 : i32
    return %c0_i32, %c0_i32_0 : i32, i32
  }
  func.func @transform_3(%arg0: i32) -> (i32, i32) {
    %c0_i32 = arith.constant 0 : i32
    %c0_i32_0 = arith.constant 0 : i32
    return %c0_i32, %arg0 : i32, i32
  }
}

</mosaic_0001>

<llo_original>
// kernel: tpu_custom_call.1
$region0: #{tpu_custom_call.1}
  #allocation0 [shape = 'u32[]', space=smem, size = 0x4, offset = 0x4, fixed_abs, tag = 'smem constant byte address 0x4 - core index']
  #allocation1 [shape = 'u32[72,128]{1,0:T(1,128)}', space=vmem, size = 0x9000, scoped, tag = 'internal scratch']
  %s0 = inlined_call_operand.vmem [shape: f32[1,2048], index: 0, kind: input, shape index: {}]
  %s1 = inlined_call_operand.vmem [shape: f32[64,9], index: 1, kind: input, shape index: {}]
  %s2 = inlined_call_operand.vmem [shape: f32[64,1], index: 2, kind: input, shape index: {}]
  %s3 = inlined_call_operand.hbm [shape: bf16[64,2048], index: 3, kind: output, shape index: {}]
  %s4 = sld [smem:[#allocation0]]
  $region45: #{tpu_custom_call.1} parent=0
    _
  %s6 = ssub.s32 1, %s4
  %s7 = scalar_select 0, %s6, %s4
  $region1: #{tpu_custom_call.1} parent=0
    #allocation2 [shape = 'u8[262144]{0}', space=vmem, size = 0x40000, scoped, tag = 'output window, operand 0']
    #allocation3 [shape = 's32[2]{0}', space=sflag, size = 0x8, scoped, tag = 'scoped memory for tpu_custom_call.1']
    %8 = vsyncpa [#allocation3], 0
    %s9 = scalar_lea.sflag [#allocation3], 1
    %10 = vsyncpa %s9, 0
    loop: start=0, step=1, limit=4
    $region2: #{tpu_custom_call.1} parent=1 // loop_pre_header
      _
    $region3: #{tpu_custom_call.1} parent=1 // loop_header
      %s12 = sphi 0, %s16
      %p13 = scmp.ge.s32.totalorder %s12, 4
      %s22 = sphi 0, %s24
      %s25 = sphi 0, %s22
      %s26 = sphi 0, %s25
      %s42 = sphi 0, %s26
      %s46 = sphi 0, %s46
      %s48 = sphi 0, %s46
      %s49 = sphi 0, %s48
      %s63 = sphi 0, %s49
      %s67 = sphi 0, %s67
      %s69 = sphi 0, %s67
      %s70 = sphi 0, %s69
      %s84 = sphi 0, %s70
      %s90 = sphi 0, %s92
      %s93 = sphi 0, %s90
      %s94 = sphi 0, %s93
      %s110 = sphi 0, %s94
    $region4: #{tpu_custom_call.1} parent=1 // loop_header_branch
      %15 = sbr.rel (%p13) target = $region8
    $region5: #{tpu_custom_call.1} parent=1 // loop_body
      %s17 = ssub.s32 %s12, 1
      %s18 = ssub.s32 %s12, 2
      %s19 = sadd.s32 %s12, 1
      %s20 = ssub.s32 %s12, %s19
      %p21 = scmp.eq.s32.totalorder %s20, 0
      %s23 = sadd.s32 %s22, 1
      %s24 = scalar_select %p21, %s22, %s23
      %p27 = pneg %p21
      %p28 = scmp.eq.s32.totalorder %s12, 1
      %p29 = por %p27, %p28
      %p30 = scmp.ne.s32.totalorder %s22, %s25
      %p31 = scmp.eq.s32.totalorder %s12, 0
      %p32 = por %p30, %p31
      %p33 = scmp.ne.s32.totalorder %s22, %s25
      %p34 = scmp.eq.s32.totalorder %s17, 1
      %p35 = por %p33, %p34
      %p36 = scmp.ne.s32.totalorder %s25, %s26
      %p37 = scmp.eq.s32.totalorder %s17, 0
      %p38 = por %p36, %p37
      %p39 = scmp.ne.s32.totalorder %s25, %s26
      %p40 = scmp.eq.s32.totalorder %s18, 1
      %p41 = por %p39, %p40
      %p43 = scmp.ne.s32.totalorder %s26, %s42
      %p44 = scmp.eq.s32.totalorder %s18, 0
      %p45 = por %p43, %p44
      %s47 = sadd.s32 %s46, 1
      %p50 = scmp.eq.s32.totalorder %s12, 1
      %p51 = scmp.ne.s32.totalorder %s46, %s48
      %p52 = scmp.eq.s32.totalorder %s12, 0
      %p53 = por %p51, %p52
      %p54 = scmp.ne.s32.totalorder %s46, %s48
      %p55 = scmp.eq.s32.totalorder %s17, 1
      %p56 = por %p54, %p55
      %p57 = scmp.ne.s32.totalorder %s48, %s49
      %p58 = scmp.eq.s32.totalorder %s17, 0
      %p59 = por %p57, %p58
      %p60 = scmp.ne.s32.totalorder %s48, %s49
      %p61 = scmp.eq.s32.totalorder %s18, 1
      %p62 = por %p60, %p61
      %p64 = scmp.ne.s32.totalorder %s49, %s63
      %p65 = scmp.eq.s32.totalorder %s18, 0
      %p66 = por %p64, %p65
      %s68 = sadd.s32 %s67, 1
      %p71 = scmp.eq.s32.totalorder %s12, 1
      %p72 = scmp.ne.s32.totalorder %s67, %s69
      %p73 = scmp.eq.s32.totalorder %s12, 0
      %p74 = por %p72, %p73
      %p75 = scmp.ne.s32.totalorder %s67, %s69
      %p76 = scmp.eq.s32.totalorder %s17, 1
      %p77 = por %p75, %p76
      %p78 = scmp.ne.s32.totalorder %s69, %s70
      %p79 = scmp.eq.s32.totalorder %s17, 0
      %p80 = por %p78, %p79
      %p81 = scmp.ne.s32.totalorder %s69, %s70
      %p82 = scmp.eq.s32.totalorder %s18, 1
      %p83 = por %p81, %p82
      %p85 = scmp.ne.s32.totalorder %s70, %s84
      %p86 = scmp.eq.s32.totalorder %s18, 0
      %p87 = por %p85, %p86
      %s88 = ssub.s32 %s12, %s19
      %p89 = scmp.eq.s32.totalorder %s88, 0
      %s91 = sadd.s32 %s90, 1
      %s92 = scalar_select %p89, %s90, %s91
      %p95 = pneg %p89
      %p96 = scmp.eq.s32.totalorder %s12, 1
      %p97 = por %p95, %p96
      %p98 = scmp.ne.s32.totalorder %s90, %s93
      %p99 = scmp.eq.s32.totalorder %s12, 0
      %p100 = por %p98, %p99
      %p101 = scmp.ne.s32.totalorder %s90, %s93
      %p102 = scmp.eq.s32.totalorder %s17, 1
      %p103 = por %p101, %p102
      %p104 = scmp.ne.s32.totalorder %s93, %s94
      %p105 = scmp.eq.s32.totalorder %s17, 0
      %p106 = por %p104, %p105
      %p107 = scmp.ne.s32.totalorder %s93, %s94
      %p108 = scmp.eq.s32.totalorder %s18, 1
      %p109 = por %p107, %p108
      %p111 = scmp.ne.s32.totalorder %s94, %s110
      %p112 = scmp.eq.s32.totalorder %s18, 0
      %p113 = por %p111, %p112
      %p114 = scmp.le.s32.totalorder 1, %s12
      %p115 = scmp.lt.s32.totalorder %s12, 3
      %p116 = pnand %p114, %p115
      %p117 = pneg %p116
      // Predicated region
      $region9: #{tpu_custom_call.1} parent=5 // pred_check
        _
      $region10: #{tpu_custom_call.1} parent=5 // pred_check_branch
        %119 = sbr.rel (%p116) target = $region12
      $region11: #{tpu_custom_call.1} parent=5 // pred_region
        %s120 = ssub.s32 %s12, 1
        // Predicated region
        $region13: #{tpu_custom_call.1} parent=11 // pred_check
          %p121 = pneg %p59
        $region14: #{tpu_custom_call.1} parent=11 // pred_check_branch
          %123 = sbr.rel (%p121) target = $region16
        $region15: #{tpu_custom_call.1} parent=11 // pred_region
          _
        $region16: #{tpu_custom_call.1} parent=11 // pred_fallthru
          _
        // Predicated region
        $region17: #{tpu_custom_call.1} parent=11 // pred_check
          %p124 = pneg %p80
        $region18: #{tpu_custom_call.1} parent=11 // pred_check_branch
          %126 = sbr.rel (%p124) target = $region20
        $region19: #{tpu_custom_call.1} parent=11 // pred_region
          _
        $region20: #{tpu_custom_call.1} parent=11 // pred_fallthru
          _
      $region12: #{tpu_custom_call.1} parent=5 // pred_fallthru
        _
      %p127 = scmp.lt.s32.totalorder %s12, 2
      // Predicated region
      $region21: #{tpu_custom_call.1} parent=5 // pred_check
        %p128 = pneg %p127
      $region22: #{tpu_custom_call.1} parent=5 // pred_check_branch
        %130 = sbr.rel (%p128) target = $region24
      $region23: #{tpu_custom_call.1} parent=5 // pred_region
        // Predicated region
        $region25: #{tpu_custom_call.1} parent=23 // pred_check
          %p131 = pneg %p32
        $region26: #{tpu_custom_call.1} parent=23 // pred_check_branch
          %133 = sbr.rel (%p131) target = $region28
        $region27: #{tpu_custom_call.1} parent=23 // pred_region
          %s134 = smul.u32 8, %s12
          %p135 = scmp.lt.s32.totalorder %s134, 15
          %s136 = scalar_select %p135, %s134, 15
          %s137 = scalar_lea.vmem %s0, %s136
          %s138 = smul.u32 8, %s12
        $region28: #{tpu_custom_call.1} parent=23 // pred_fallthru
          _
      $region24: #{tpu_custom_call.1} parent=5 // pred_fallthru
        _
      %p139 = scmp.le.s32.totalorder 1, %s12
      %p140 = scmp.lt.s32.totalorder %s12, 3
      %p141 = pnand %p139, %p140
      %p142 = pneg %p141
      // Predicated region
      $region29: #{tpu_custom_call.1} parent=5 // pred_check
        _
      $region30: #{tpu_custom_call.1} parent=5 // pred_check_branch
        %144 = sbr.rel (%p141) target = $region32
      $region31: #{tpu_custom_call.1} parent=5 // pred_region
        %s145 = ssub.s32 %s12, 1
        %s146 = smul.u32 8, %s17
        %p147 = scmp.lt.s32.totalorder %s146, 15
        %s148 = scalar_select %p147, %s146, 15
        %s149 = scalar_lea.vmem %s0, %s148
        %p150 = pneg %p38
        %p151 = pneg %p35
        %p152 = pneg %p59
        %p153 = pneg %p56
        %p154 = pneg %p80
        %p155 = pneg %p77
        %p156 = pneg %p106
        %p157 = pneg %p103
        %s158 = sand.u32 %s93, 1
        %s159 = scalar_lea.sflag [#allocation3], %s158
        %s160 = sand.u32 %s93, 1
        %s161 = smul.addr %s160, 256
        %s162 = scalar_lea.vmem [#allocation2], %s161
        %s163 = smul.u32 8, %s17
        %p164 = scmp.lt.s32.totalorder %s163, 15
        %s165 = scalar_select %p164, %s163, 15
        %s166 = scalar_lea.vmem %s0, %s165
        %s167 = smul.u32 8, %s17
        %s168 = smul.u32 8, %s17
        %v169 = vld [vmem:[%s166] sm:$0xff]
        %v170 = vld [vmem:[%s1] sm:$0xff]
        %v171 = vld [vmem:[%s1 + $0x8] sm:$0xff]
        %v172 = vld [vmem:[%s1 + $0x10] sm:$0xff]
        %v173 = vld [vmem:[%s1 + $0x18] sm:$0xff]
        %v174 = vld [vmem:[%s1 + $0x20] sm:$0xff]
        %v175 = vld [vmem:[%s1 + $0x28] sm:$0xff]
        %v176 = vld [vmem:[%s1 + $0x30] sm:$0xff]
        %v177 = vld [vmem:[%s1 + $0x38] sm:$0xff]
        %179 = vset.pattern.permute.xlu0 0
        %180 = vperm.xlu0 %179, %v170
        %v181 = vpop.permute.xlu0 %180
        %184 = vset.pattern.permute.xlu0 0
        %185 = vperm.xlu0 %184, %v171
        %v186 = vpop.permute.xlu0 %185
        %189 = vset.pattern.permute.xlu0 0
        %190 = vperm.xlu0 %189, %v172
        %v191 = vpop.permute.xlu0 %190
        %194 = vset.pattern.permute.xlu0 0
        %195 = vperm.xlu0 %194, %v173
        %v196 = vpop.permute.xlu0 %195
        %199 = vset.pattern.permute.xlu0 0
        %200 = vperm.xlu0 %199, %v174
        %v201 = vpop.permute.xlu0 %200
        %204 = vset.pattern.permute.xlu0 0
        %205 = vperm.xlu0 %204, %v175
        %v206 = vpop.permute.xlu0 %205
        %209 = vset.pattern.permute.xlu0 0
        %210 = vperm.xlu0 %209, %v176
        %v211 = vpop.permute.xlu0 %210
        %214 = vset.pattern.permute.xlu0 0
        %215 = vperm.xlu0 %214, %v177
        %v216 = vpop.permute.xlu0 %215
        %v219 = vperm.slane %v169, 0
        %v220 = vperm.slane %v169, 1
        %v221 = vperm.slane %v169, 2
        %v222 = vperm.slane %v169, 3
        %v223 = vperm.slane %v169, 4
        %v224 = vperm.slane %v169, 5
        %v225 = vperm.slane %v169, 6
        %v226 = vperm.slane %v169, 7
        %v235 = vmul.f32 %v181, %v219
        %v236 = vmul.f32 %v181, %v220
        %v237 = vmul.f32 %v181, %v221
        %v238 = vmul.f32 %v181, %v222
        %v239 = vmul.f32 %v181, %v223
        %v240 = vmul.f32 %v181, %v224
        %v241 = vmul.f32 %v181, %v225
        %v242 = vmul.f32 %v181, %v226
        %v243 = vmul.f32 %v186, %v219
        %v244 = vmul.f32 %v186, %v220
        %v245 = vmul.f32 %v186, %v221
        %v246 = vmul.f32 %v186, %v222
        %v247 = vmul.f32 %v186, %v223
        %v248 = vmul.f32 %v186, %v224
        %v249 = vmul.f32 %v186, %v225
        %v250 = vmul.f32 %v186, %v226
        %v251 = vmul.f32 %v191, %v219
        %v252 = vmul.f32 %v191, %v220
        %v253 = vmul.f32 %v191, %v221
        %v254 = vmul.f32 %v191, %v222
        %v255 = vmul.f32 %v191, %v223
        %v256 = vmul.f32 %v191, %v224
        %v257 = vmul.f32 %v191, %v225
        %v258 = vmul.f32 %v191, %v226
        %v259 = vmul.f32 %v196, %v219
        %v260 = vmul.f32 %v196, %v220
        %v261 = vmul.f32 %v196, %v221
        %v262 = vmul.f32 %v196, %v222
        %v263 = vmul.f32 %v196, %v223
        %v264 = vmul.f32 %v196, %v224
        %v265 = vmul.f32 %v196, %v225
        %v266 = vmul.f32 %v196, %v226
        %v267 = vmul.f32 %v201, %v219
        %v268 = vmul.f32 %v201, %v220
        %v269 = vmul.f32 %v201, %v221
        %v270 = vmul.f32 %v201, %v222
        %v271 = vmul.f32 %v201, %v223
        %v272 = vmul.f32 %v201, %v224
        %v273 = vmul.f32 %v201, %v225
        %v274 = vmul.f32 %v201, %v226
        %v275 = vmul.f32 %v206, %v219
        %v276 = vmul.f32 %v206, %v220
        %v277 = vmul.f32 %v206, %v221
        %v278 = vmul.f32 %v206, %v222
        %v279 = vmul.f32 %v206, %v223
        %v280 = vmul.f32 %v206, %v224
        %v281 = vmul.f32 %v206, %v225
        %v282 = vmul.f32 %v206, %v226
        %v283 = vmul.f32 %v211, %v219
        %v284 = vmul.f32 %v211, %v220
        %v285 = vmul.f32 %v211, %v221
        %v286 = vmul.f32 %v211, %v222
        %v287 = vmul.f32 %v211, %v223
        %v288 = vmul.f32 %v211, %v224
        %v289 = vmul.f32 %v211, %v225
        %v290 = vmul.f32 %v211, %v226
        %v291 = vmul.f32 %v216, %v219
        %v292 = vmul.f32 %v216, %v220
        %v293 = vmul.f32 %v216, %v221
        %v294 = vmul.f32 %v216, %v222
        %v295 = vmul.f32 %v216, %v223
        %v296 = vmul.f32 %v216, %v224
        %v297 = vmul.f32 %v216, %v225
        %v298 = vmul.f32 %v216, %v226
        %299 = vrot.lane.b32.xlu0 %v219, 127
        %v300 = vpop.permute.xlu0 %299
        %301 = vrot.lane.b32.xlu0 %v220, 127
        %v302 = vpop.permute.xlu0 %301
        %303 = vrot.lane.b32.xlu0 %v221, 127
        %v304 = vpop.permute.xlu0 %303
        %305 = vrot.lane.b32.xlu0 %v222, 127
        %v306 = vpop.permute.xlu0 %305
        %307 = vrot.lane.b32.xlu0 %v223, 127
        %v308 = vpop.permute.xlu0 %307
        %309 = vrot.lane.b32.xlu0 %v224, 127
        %v310 = vpop.permute.xlu0 %309
        %311 = vrot.lane.b32.xlu0 %v225, 127
        %v312 = vpop.permute.xlu0 %311
        %313 = vrot.lane.b32.xlu0 %v226, 127
        %v314 = vpop.permute.xlu0 %313
        %v315 = vlaneseq
        %v316 = vand.u32 %v315, 127
        %vm317 = vcmp.lt.s32.totalorder %v316, 127
        %v318 = vsel %vm317, %v312, %v314
        %v319 = vsel %vm317, %v310, %v312
        %v320 = vsel %vm317, %v308, %v310
        %v321 = vsel %vm317, %v306, %v308
        %v322 = vsel %vm317, %v304, %v306
        %v323 = vsel %vm317, %v302, %v304
        %v324 = vsel %vm317, %v300, %v302
        %v325 = vsel %vm317, %v314, %v300
        %326 = vset.pattern.permute.xlu0 1
        %327 = vperm.xlu0 %326, %v170
        %v328 = vpop.permute.xlu0 %327
        %330 = vset.pattern.permute.xlu0 1
        %331 = vperm.xlu0 %330, %v171
        %v332 = vpop.permute.xlu0 %331
        %334 = vset.pattern.permute.xlu0 1
        %335 = vperm.xlu0 %334, %v172
        %v336 = vpop.permute.xlu0 %335
        %338 = vset.pattern.permute.xlu0 1
        %339 = vperm.xlu0 %338, %v173
        %v340 = vpop.permute.xlu0 %339
        %342 = vset.pattern.permute.xlu0 1
        %343 = vperm.xlu0 %342, %v174
        %v344 = vpop.permute.xlu0 %343
        %346 = vset.pattern.permute.xlu0 1
        %347 = vperm.xlu0 %346, %v175
        %v348 = vpop.permute.xlu0 %347
        %350 = vset.pattern.permute.xlu0 1
        %351 = vperm.xlu0 %350, %v176
        %v352 = vpop.permute.xlu0 %351
        %354 = vset.pattern.permute.xlu0 1
        %355 = vperm.xlu0 %354, %v177
        %v356 = vpop.permute.xlu0 %355
        %v358 = vperm.slane %v324, 0
        %v359 = vperm.slane %v323, 0
        %v360 = vperm.slane %v322, 0
        %v361 = vperm.slane %v321, 0
        %v362 = vperm.slane %v320, 0
        %v363 = vperm.slane %v319, 0
        %v364 = vperm.slane %v318, 0
        %v365 = vperm.slane %v325, 0
        %v366 = vmul.f32 %v328, %v358
        %v367 = vmul.f32 %v328, %v359
        %v368 = vmul.f32 %v328, %v360
        %v369 = vmul.f32 %v328, %v361
        %v370 = vmul.f32 %v328, %v362
        %v371 = vmul.f32 %v328, %v363
        %v372 = vmul.f32 %v328, %v364
        %v373 = vmul.f32 %v328, %v365
        %v374 = vmul.f32 %v332, %v358
        %v375 = vmul.f32 %v332, %v359
        %v376 = vmul.f32 %v332, %v360
        %v377 = vmul.f32 %v332, %v361
        %v378 = vmul.f32 %v332, %v362
        %v379 = vmul.f32 %v332, %v363
        %v380 = vmul.f32 %v332, %v364
        %v381 = vmul.f32 %v332, %v365
        %v382 = vmul.f32 %v336, %v358
        %v383 = vmul.f32 %v336, %v359
        %v384 = vmul.f32 %v336, %v360
        %v385 = vmul.f32 %v336, %v361
        %v386 = vmul.f32 %v336, %v362
        %v387 = vmul.f32 %v336, %v363
        %v388 = vmul.f32 %v336, %v364
        %v389 = vmul.f32 %v336, %v365
        %v390 = vmul.f32 %v340, %v358
        %v391 = vmul.f32 %v340, %v359
        %v392 = vmul.f32 %v340, %v360
        %v393 = vmul.f32 %v340, %v361
        %v394 = vmul.f32 %v340, %v362
        %v395 = vmul.f32 %v340, %v363
        %v396 = vmul.f32 %v340, %v364
        %v397 = vmul.f32 %v340, %v365
        %v398 = vmul.f32 %v344, %v358
        %v399 = vmul.f32 %v344, %v359
        %v400 = vmul.f32 %v344, %v360
        %v401 = vmul.f32 %v344, %v361
        %v402 = vmul.f32 %v344, %v362
        %v403 = vmul.f32 %v344, %v363
        %v404 = vmul.f32 %v344, %v364
        %v405 = vmul.f32 %v344, %v365
        %v406 = vmul.f32 %v348, %v358
        %v407 = vmul.f32 %v348, %v359
        %v408 = vmul.f32 %v348, %v360
        %v409 = vmul.f32 %v348, %v361
        %v410 = vmul.f32 %v348, %v362
        %v411 = vmul.f32 %v348, %v363
        %v412 = vmul.f32 %v348, %v364
        %v413 = vmul.f32 %v348, %v365
        %v414 = vmul.f32 %v352, %v358
        %v415 = vmul.f32 %v352, %v359
        %v416 = vmul.f32 %v352, %v360
        %v417 = vmul.f32 %v352, %v361
        %v418 = vmul.f32 %v352, %v362
        %v419 = vmul.f32 %v352, %v363
        %v420 = vmul.f32 %v352, %v364
        %v421 = vmul.f32 %v352, %v365
        %v422 = vmul.f32 %v356, %v358
        %v423 = vmul.f32 %v356, %v359
        %v424 = vmul.f32 %v356, %v360
        %v425 = vmul.f32 %v356, %v361
        %v426 = vmul.f32 %v356, %v362
        %v427 = vmul.f32 %v356, %v363
        %v428 = vmul.f32 %v356, %v364
        %v429 = vmul.f32 %v356, %v365
        %v430 = vadd.f32 %v235, %v366
        %v431 = vadd.f32 %v236, %v367
        %v432 = vadd.f32 %v237, %v368
        %v433 = vadd.f32 %v238, %v369
        %v434 = vadd.f32 %v239, %v370
        %v435 = vadd.f32 %v240, %v371
        %v436 = vadd.f32 %v241, %v372
        %v437 = vadd.f32 %v242, %v373
        %v438 = vadd.f32 %v243, %v374
        %v439 = vadd.f32 %v244, %v375
        %v440 = vadd.f32 %v245, %v376
        %v441 = vadd.f32 %v246, %v377
        %v442 = vadd.f32 %v247, %v378
        %v443 = vadd.f32 %v248, %v379
        %v444 = vadd.f32 %v249, %v380
        %v445 = vadd.f32 %v250, %v381
        %v446 = vadd.f32 %v251, %v382
        %v447 = vadd.f32 %v252, %v383
        %v448 = vadd.f32 %v253, %v384
        %v449 = vadd.f32 %v254, %v385
        %v450 = vadd.f32 %v255, %v386
        %v451 = vadd.f32 %v256, %v387
        %v452 = vadd.f32 %v257, %v388
        %v453 = vadd.f32 %v258, %v389
        %v454 = vadd.f32 %v259, %v390
        %v455 = vadd.f32 %v260, %v391
        %v456 = vadd.f32 %v261, %v392
        %v457 = vadd.f32 %v262, %v393
        %v458 = vadd.f32 %v263, %v394
        %v459 = vadd.f32 %v264, %v395
        %v460 = vadd.f32 %v265, %v396
        %v461 = vadd.f32 %v266, %v397
        %v462 = vadd.f32 %v267, %v398
        %v463 = vadd.f32 %v268, %v399
        %v464 = vadd.f32 %v269, %v400
        %v465 = vadd.f32 %v270, %v401
        %v466 = vadd.f32 %v271, %v402
        %v467 = vadd.f32 %v272, %v403
        %v468 = vadd.f32 %v273, %v404
        %v469 = vadd.f32 %v274, %v405
        %v470 = vadd.f32 %v275, %v406
        %v471 = vadd.f32 %v276, %v407
        %v472 = vadd.f32 %v277, %v408
        %v473 = vadd.f32 %v278, %v409
        %v474 = vadd.f32 %v279, %v410
        %v475 = vadd.f32 %v280, %v411
        %v476 = vadd.f32 %v281, %v412
        %v477 = vadd.f32 %v282, %v413
        %v478 = vadd.f32 %v283, %v414
        %v479 = vadd.f32 %v284, %v415
        %v480 = vadd.f32 %v285, %v416
        %v481 = vadd.f32 %v286, %v417
        %v482 = vadd.f32 %v287, %v418
        %v483 = vadd.f32 %v288, %v419
        %v484 = vadd.f32 %v289, %v420
        %v485 = vadd.f32 %v290, %v421
        %v486 = vadd.f32 %v291, %v422
        %v487 = vadd.f32 %v292, %v423
        %v488 = vadd.f32 %v293, %v424
        %v489 = vadd.f32 %v294, %v425
        %v490 = vadd.f32 %v295, %v426
        %v491 = vadd.f32 %v296, %v427
        %v492 = vadd.f32 %v297, %v428
        %v493 = vadd.f32 %v298, %v429
        %494 = vrot.lane.b32.xlu0 %v219, 126
        %v495 = vpop.permute.xlu0 %494
        %496 = vrot.lane.b32.xlu0 %v220, 126
        %v497 = vpop.permute.xlu0 %496
        %498 = vrot.lane.b32.xlu0 %v221, 126
        %v499 = vpop.permute.xlu0 %498
        %500 = vrot.lane.b32.xlu0 %v222, 126
        %v501 = vpop.permute.xlu0 %500
        %502 = vrot.lane.b32.xlu0 %v223, 126
        %v503 = vpop.permute.xlu0 %502
        %504 = vrot.lane.b32.xlu0 %v224, 126
        %v505 = vpop.permute.xlu0 %504
        %506 = vrot.lane.b32.xlu0 %v225, 126
        %v507 = vpop.permute.xlu0 %506
        %508 = vrot.lane.b32.xlu0 %v226, 126
        %v509 = vpop.permute.xlu0 %508
        %vm510 = vcmp.lt.s32.totalorder %v316, 126
        %v511 = vsel %vm510, %v507, %v509
        %v512 = vsel %vm510, %v505, %v507
        %v513 = vsel %vm510, %v503, %v505
        %v514 = vsel %vm510, %v501, %v503
        %v515 = vsel %vm510, %v499, %v501
        %v516 = vsel %vm510, %v497, %v499
        %v517 = vsel %vm510, %v495, %v497
        %v518 = vsel %vm510, %v509, %v495
        %519 = vset.pattern.permute.xlu0 2
        %520 = vperm.xlu0 %519, %v170
        %v521 = vpop.permute.xlu0 %520
        %523 = vset.pattern.permute.xlu0 2
        %524 = vperm.xlu0 %523, %v171
        %v525 = vpop.permute.xlu0 %524
        %527 = vset.pattern.permute.xlu0 2
        %528 = vperm.xlu0 %527, %v172
        %v529 = vpop.permute.xlu0 %528
        %531 = vset.pattern.permute.xlu0 2
        %532 = vperm.xlu0 %531, %v173
        %v533 = vpop.permute.xlu0 %532
        %535 = vset.pattern.permute.xlu0 2
        %536 = vperm.xlu0 %535, %v174
        %v537 = vpop.permute.xlu0 %536
        %539 = vset.pattern.permute.xlu0 2
        %540 = vperm.xlu0 %539, %v175
        %v541 = vpop.permute.xlu0 %540
        %543 = vset.pattern.permute.xlu0 2
        %544 = vperm.xlu0 %543, %v176
        %v545 = vpop.permute.xlu0 %544
        %547 = vset.pattern.permute.xlu0 2
        %548 = vperm.xlu0 %547, %v177
        %v549 = vpop.permute.xlu0 %548
        %v551 = vperm.slane %v517, 0
        %v552 = vperm.slane %v516, 0
        %v553 = vperm.slane %v515, 0
        %v554 = vperm.slane %v514, 0
        %v555 = vperm.slane %v513, 0
        %v556 = vperm.slane %v512, 0
        %v557 = vperm.slane %v511, 0
        %v558 = vperm.slane %v518, 0
        %v559 = vmul.f32 %v521, %v551
        %v560 = vmul.f32 %v521, %v552
        %v561 = vmul.f32 %v521, %v553
        %v562 = vmul.f32 %v521, %v554
        %v563 = vmul.f32 %v521, %v555
        %v564 = vmul.f32 %v521, %v556
        %v565 = vmul.f32 %v521, %v557
        %v566 = vmul.f32 %v521, %v558
        %v567 = vmul.f32 %v525, %v551
        %v568 = vmul.f32 %v525, %v552
        %v569 = vmul.f32 %v525, %v553
        %v570 = vmul.f32 %v525, %v554
        %v571 = vmul.f32 %v525, %v555
        %v572 = vmul.f32 %v525, %v556
        %v573 = vmul.f32 %v525, %v557
        %v574 = vmul.f32 %v525, %v558
        %v575 = vmul.f32 %v529, %v551
        %v576 = vmul.f32 %v529, %v552
        %v577 = vmul.f32 %v529, %v553
        %v578 = vmul.f32 %v529, %v554
        %v579 = vmul.f32 %v529, %v555
        %v580 = vmul.f32 %v529, %v556
        %v581 = vmul.f32 %v529, %v557
        %v582 = vmul.f32 %v529, %v558
        %v583 = vmul.f32 %v533, %v551
        %v584 = vmul.f32 %v533, %v552
        %v585 = vmul.f32 %v533, %v553
        %v586 = vmul.f32 %v533, %v554
        %v587 = vmul.f32 %v533, %v555
        %v588 = vmul.f32 %v533, %v556
        %v589 = vmul.f32 %v533, %v557
        %v590 = vmul.f32 %v533, %v558
        %v591 = vmul.f32 %v537, %v551
        %v592 = vmul.f32 %v537, %v552
        %v593 = vmul.f32 %v537, %v553
        %v594 = vmul.f32 %v537, %v554
        %v595 = vmul.f32 %v537, %v555
        %v596 = vmul.f32 %v537, %v556
        %v597 = vmul.f32 %v537, %v557
        %v598 = vmul.f32 %v537, %v558
        %v599 = vmul.f32 %v541, %v551
        %v600 = vmul.f32 %v541, %v552
        %v601 = vmul.f32 %v541, %v553
        %v602 = vmul.f32 %v541, %v554
        %v603 = vmul.f32 %v541, %v555
        %v604 = vmul.f32 %v541, %v556
        %v605 = vmul.f32 %v541, %v557
        %v606 = vmul.f32 %v541, %v558
        %v607 = vmul.f32 %v545, %v551
        %v608 = vmul.f32 %v545, %v552
        %v609 = vmul.f32 %v545, %v553
        %v610 = vmul.f32 %v545, %v554
        %v611 = vmul.f32 %v545, %v555
        %v612 = vmul.f32 %v545, %v556
        %v613 = vmul.f32 %v545, %v557
        %v614 = vmul.f32 %v545, %v558
        %v615 = vmul.f32 %v549, %v551
        %v616 = vmul.f32 %v549, %v552
        %v617 = vmul.f32 %v549, %v553
        %v618 = vmul.f32 %v549, %v554
        %v619 = vmul.f32 %v549, %v555
        %v620 = vmul.f32 %v549, %v556
        %v621 = vmul.f32 %v549, %v557
        %v622 = vmul.f32 %v549, %v558
        %v623 = vadd.f32 %v430, %v559
        %v624 = vadd.f32 %v431, %v560
        %v625 = vadd.f32 %v432, %v561
        %v626 = vadd.f32 %v433, %v562
        %v627 = vadd.f32 %v434, %v563
        %v628 = vadd.f32 %v435, %v564
        %v629 = vadd.f32 %v436, %v565
        %v630 = vadd.f32 %v437, %v566
        %v631 = vadd.f32 %v438, %v567
        %v632 = vadd.f32 %v439, %v568
        %v633 = vadd.f32 %v440, %v569
        %v634 = vadd.f32 %v441, %v570
        %v635 = vadd.f32 %v442, %v571
        %v636 = vadd.f32 %v443, %v572
        %v637 = vadd.f32 %v444, %v573
        %v638 = vadd.f32 %v445, %v574
        %v639 = vadd.f32 %v446, %v575
        %v640 = vadd.f32 %v447, %v576
        %v641 = vadd.f32 %v448, %v577
        %v642 = vadd.f32 %v449, %v578
        %v643 = vadd.f32 %v450, %v579
        %v644 = vadd.f32 %v451, %v580
        %v645 = vadd.f32 %v452, %v581
        %v646 = vadd.f32 %v453, %v582
        %v647 = vadd.f32 %v454, %v583
        %v648 = vadd.f32 %v455, %v584
        %v649 = vadd.f32 %v456, %v585
        %v650 = vadd.f32 %v457, %v586
        %v651 = vadd.f32 %v458, %v587
        %v652 = vadd.f32 %v459, %v588
        %v653 = vadd.f32 %v460, %v589
        %v654 = vadd.f32 %v461, %v590
        %v655 = vadd.f32 %v462, %v591
        %v656 = vadd.f32 %v463, %v592
        %v657 = vadd.f32 %v464, %v593
        %v658 = vadd.f32 %v465, %v594
        %v659 = vadd.f32 %v466, %v595
        %v660 = vadd.f32 %v467, %v596
        %v661 = vadd.f32 %v468, %v597
        %v662 = vadd.f32 %v469, %v598
        %v663 = vadd.f32 %v470, %v599
        %v664 = vadd.f32 %v471, %v600
        %v665 = vadd.f32 %v472, %v601
        %v666 = vadd.f32 %v473, %v602
        %v667 = vadd.f32 %v474, %v603
        %v668 = vadd.f32 %v475, %v604
        %v669 = vadd.f32 %v476, %v605
        %v670 = vadd.f32 %v477, %v606
        %v671 = vadd.f32 %v478, %v607
        %v672 = vadd.f32 %v479, %v608
        %v673 = vadd.f32 %v480, %v609
        %v674 = vadd.f32 %v481, %v610
        %v675 = vadd.f32 %v482, %v611
        %v676 = vadd.f32 %v483, %v612
        %v677 = vadd.f32 %v484, %v613
        %v678 = vadd.f32 %v485, %v614
        %v679 = vadd.f32 %v486, %v615
        %v680 = vadd.f32 %v487, %v616
        %v681 = vadd.f32 %v488, %v617
        %v682 = vadd.f32 %v489, %v618
        %v683 = vadd.f32 %v490, %v619
        %v684 = vadd.f32 %v491, %v620
        %v685 = vadd.f32 %v492, %v621
        %v686 = vadd.f32 %v493, %v622
        %687 = vrot.lane.b32.xlu0 %v219, 96
        %v688 = vpop.permute.xlu0 %687
        %689 = vrot.lane.b32.xlu0 %v220, 96
        %v690 = vpop.permute.xlu0 %689
        %691 = vrot.lane.b32.xlu0 %v221, 96
        %v692 = vpop.permute.xlu0 %691
        %693 = vrot.lane.b32.xlu0 %v222, 96
        %v694 = vpop.permute.xlu0 %693
        %695 = vrot.lane.b32.xlu0 %v223, 96
        %v696 = vpop.permute.xlu0 %695
        %697 = vrot.lane.b32.xlu0 %v224, 96
        %v698 = vpop.permute.xlu0 %697
        %699 = vrot.lane.b32.xlu0 %v225, 96
        %v700 = vpop.permute.xlu0 %699
        %701 = vrot.lane.b32.xlu0 %v226, 96
        %v702 = vpop.permute.xlu0 %701
        %vm703 = vcmp.lt.s32.totalorder %v316, 96
        %v704 = vsel %vm703, %v700, %v702
        %v705 = vsel %vm703, %v698, %v700
        %v706 = vsel %vm703, %v696, %v698
        %v707 = vsel %vm703, %v694, %v696
        %v708 = vsel %vm703, %v692, %v694
        %v709 = vsel %vm703, %v690, %v692
        %v710 = vsel %vm703, %v688, %v690
        %v711 = vsel %vm703, %v702, %v688
        %712 = vset.pattern.permute.xlu0 3
        %713 = vperm.xlu0 %712, %v170
        %v714 = vpop.permute.xlu0 %713
        %716 = vset.pattern.permute.xlu0 3
        %717 = vperm.xlu0 %716, %v171
        %v718 = vpop.permute.xlu0 %717
        %720 = vset.pattern.permute.xlu0 3
        %721 = vperm.xlu0 %720, %v172
        %v722 = vpop.permute.xlu0 %721
        %724 = vset.pattern.permute.xlu0 3
        %725 = vperm.xlu0 %724, %v173
        %v726 = vpop.permute.xlu0 %725
        %728 = vset.pattern.permute.xlu0 3
        %729 = vperm.xlu0 %728, %v174
        %v730 = vpop.permute.xlu0 %729
        %732 = vset.pattern.permute.xlu0 3
        %733 = vperm.xlu0 %732, %v175
        %v734 = vpop.permute.xlu0 %733
        %736 = vset.pattern.permute.xlu0 3
        %737 = vperm.xlu0 %736, %v176
        %v738 = vpop.permute.xlu0 %737
        %740 = vset.pattern.permute.xlu0 3
        %741 = vperm.xlu0 %740, %v177
        %v742 = vpop.permute.xlu0 %741
        %v744 = vperm.slane %v710, 0
        %v745 = vperm.slane %v709, 0
        %v746 = vperm.slane %v708, 0
        %v747 = vperm.slane %v707, 0
        %v748 = vperm.slane %v706, 0
        %v749 = vperm.slane %v705, 0
        %v750 = vperm.slane %v704, 0
        %v751 = vperm.slane %v711, 0
        %v752 = vmul.f32 %v714, %v744
        %v753 = vmul.f32 %v714, %v745
        %v754 = vmul.f32 %v714, %v746
        %v755 = vmul.f32 %v714, %v747
        %v756 = vmul.f32 %v714, %v748
        %v757 = vmul.f32 %v714, %v749
        %v758 = vmul.f32 %v714, %v750
        %v759 = vmul.f32 %v714, %v751
        %v760 = vmul.f32 %v718, %v744
        %v761 = vmul.f32 %v718, %v745
        %v762 = vmul.f32 %v718, %v746
        %v763 = vmul.f32 %v718, %v747
        %v764 = vmul.f32 %v718, %v748
        %v765 = vmul.f32 %v718, %v749
        %v766 = vmul.f32 %v718, %v750
        %v767 = vmul.f32 %v718, %v751
        %v768 = vmul.f32 %v722, %v744
        %v769 = vmul.f32 %v722, %v745
        %v770 = vmul.f32 %v722, %v746
        %v771 = vmul.f32 %v722, %v747
        %v772 = vmul.f32 %v722, %v748
        %v773 = vmul.f32 %v722, %v749
        %v774 = vmul.f32 %v722, %v750
        %v775 = vmul.f32 %v722, %v751
        %v776 = vmul.f32 %v726, %v744
        %v777 = vmul.f32 %v726, %v745
        %v778 = vmul.f32 %v726, %v746
        %v779 = vmul.f32 %v726, %v747
        %v780 = vmul.f32 %v726, %v748
        %v781 = vmul.f32 %v726, %v749
        %v782 = vmul.f32 %v726, %v750
        %v783 = vmul.f32 %v726, %v751
        %v784 = vmul.f32 %v730, %v744
        %v785 = vmul.f32 %v730, %v745
        %v786 = vmul.f32 %v730, %v746
        %v787 = vmul.f32 %v730, %v747
        %v788 = vmul.f32 %v730, %v748
        %v789 = vmul.f32 %v730, %v749
        %v790 = vmul.f32 %v730, %v750
        %v791 = vmul.f32 %v730, %v751
        %v792 = vmul.f32 %v734, %v744
        %v793 = vmul.f32 %v734, %v745
        %v794 = vmul.f32 %v734, %v746
        %v795 = vmul.f32 %v734, %v747
        %v796 = vmul.f32 %v734, %v748
        %v797 = vmul.f32 %v734, %v749
        %v798 = vmul.f32 %v734, %v750
        %v799 = vmul.f32 %v734, %v751
        %v800 = vmul.f32 %v738, %v744
        %v801 = vmul.f32 %v738, %v745
        %v802 = vmul.f32 %v738, %v746
        %v803 = vmul.f32 %v738, %v747
        %v804 = vmul.f32 %v738, %v748
        %v805 = vmul.f32 %v738, %v749
        %v806 = vmul.f32 %v738, %v750
        %v807 = vmul.f32 %v738, %v751
        %v808 = vmul.f32 %v742, %v744
        %v809 = vmul.f32 %v742, %v745
        %v810 = vmul.f32 %v742, %v746
        %v811 = vmul.f32 %v742, %v747
        %v812 = vmul.f32 %v742, %v748
        %v813 = vmul.f32 %v742, %v749
        %v814 = vmul.f32 %v742, %v750
        %v815 = vmul.f32 %v742, %v751
        %v816 = vadd.f32 %v623, %v752
        %v817 = vadd.f32 %v624, %v753
        %v818 = vadd.f32 %v625, %v754
        %v819 = vadd.f32 %v626, %v755
        %v820 = vadd.f32 %v627, %v756
        %v821 = vadd.f32 %v628, %v757
        %v822 = vadd.f32 %v629, %v758
        %v823 = vadd.f32 %v630, %v759
        %v824 = vadd.f32 %v631, %v760
        %v825 = vadd.f32 %v632, %v761
        %v826 = vadd.f32 %v633, %v762
        %v827 = vadd.f32 %v634, %v763
        %v828 = vadd.f32 %v635, %v764
        %v829 = vadd.f32 %v636, %v765
        %v830 = vadd.f32 %v637, %v766
        %v831 = vadd.f32 %v638, %v767
        %v832 = vadd.f32 %v639, %v768
        %v833 = vadd.f32 %v640, %v769
        %v834 = vadd.f32 %v641, %v770
        %v835 = vadd.f32 %v642, %v771
        %v836 = vadd.f32 %v643, %v772
        %v837 = vadd.f32 %v644, %v773
        %v838 = vadd.f32 %v645, %v774
        %v839 = vadd.f32 %v646, %v775
        %v840 = vadd.f32 %v647, %v776
        %v841 = vadd.f32 %v648, %v777
        %v842 = vadd.f32 %v649, %v778
        %v843 = vadd.f32 %v650, %v779
        %v844 = vadd.f32 %v651, %v780
        %v845 = vadd.f32 %v652, %v781
        %v846 = vadd.f32 %v653, %v782
        %v847 = vadd.f32 %v654, %v783
        %v848 = vadd.f32 %v655, %v784
        %v849 = vadd.f32 %v656, %v785
        %v850 = vadd.f32 %v657, %v786
        %v851 = vadd.f32 %v658, %v787
        %v852 = vadd.f32 %v659, %v788
        %v853 = vadd.f32 %v660, %v789
        %v854 = vadd.f32 %v661, %v790
        %v855 = vadd.f32 %v662, %v791
        %v856 = vadd.f32 %v663, %v792
        %v857 = vadd.f32 %v664, %v793
        %v858 = vadd.f32 %v665, %v794
        %v859 = vadd.f32 %v666, %v795
        %v860 = vadd.f32 %v667, %v796
        %v861 = vadd.f32 %v668, %v797
        %v862 = vadd.f32 %v669, %v798
        %v863 = vadd.f32 %v670, %v799
        %v864 = vadd.f32 %v671, %v800
        %v865 = vadd.f32 %v672, %v801
        %v866 = vadd.f32 %v673, %v802
        %v867 = vadd.f32 %v674, %v803
        %v868 = vadd.f32 %v675, %v804
        %v869 = vadd.f32 %v676, %v805
        %v870 = vadd.f32 %v677, %v806
        %v871 = vadd.f32 %v678, %v807
        %v872 = vadd.f32 %v679, %v808
        %v873 = vadd.f32 %v680, %v809
        %v874 = vadd.f32 %v681, %v810
        %v875 = vadd.f32 %v682, %v811
        %v876 = vadd.f32 %v683, %v812
        %v877 = vadd.f32 %v684, %v813
        %v878 = vadd.f32 %v685, %v814
        %v879 = vadd.f32 %v686, %v815
        %880 = vrot.lane.b32.xlu0 %v219, 95
        %v881 = vpop.permute.xlu0 %880
        %882 = vrot.lane.b32.xlu0 %v220, 95
        %v883 = vpop.permute.xlu0 %882
        %884 = vrot.lane.b32.xlu0 %v221, 95
        %v885 = vpop.permute.xlu0 %884
        %886 = vrot.lane.b32.xlu0 %v222, 95
        %v887 = vpop.permute.xlu0 %886
        %888 = vrot.lane.b32.xlu0 %v223, 95
        %v889 = vpop.permute.xlu0 %888
        %890 = vrot.lane.b32.xlu0 %v224, 95
        %v891 = vpop.permute.xlu0 %890
        %892 = vrot.lane.b32.xlu0 %v225, 95
        %v893 = vpop.permute.xlu0 %892
        %894 = vrot.lane.b32.xlu0 %v226, 95
        %v895 = vpop.permute.xlu0 %894
        %vm896 = vcmp.lt.s32.totalorder %v316, 95
        %v897 = vsel %vm896, %v893, %v895
        %v898 = vsel %vm896, %v891, %v893
        %v899 = vsel %vm896, %v889, %v891
        %v900 = vsel %vm896, %v887, %v889
        %v901 = vsel %vm896, %v885, %v887
        %v902 = vsel %vm896, %v883, %v885
        %v903 = vsel %vm896, %v881, %v883
        %v904 = vsel %vm896, %v895, %v881
        %905 = vset.pattern.permute.xlu0 4
        %906 = vperm.xlu0 %905, %v170
        %v907 = vpop.permute.xlu0 %906
        %909 = vset.pattern.permute.xlu0 4
        %910 = vperm.xlu0 %909, %v171
        %v911 = vpop.permute.xlu0 %910
        %913 = vset.pattern.permute.xlu0 4
        %914 = vperm.xlu0 %913, %v172
        %v915 = vpop.permute.xlu0 %914
        %917 = vset.pattern.permute.xlu0 4
        %918 = vperm.xlu0 %917, %v173
        %v919 = vpop.permute.xlu0 %918
        %921 = vset.pattern.permute.xlu0 4
        %922 = vperm.xlu0 %921, %v174
        %v923 = vpop.permute.xlu0 %922
        %925 = vset.pattern.permute.xlu0 4
        %926 = vperm.xlu0 %925, %v175
        %v927 = vpop.permute.xlu0 %926
        %929 = vset.pattern.permute.xlu0 4
        %930 = vperm.xlu0 %929, %v176
        %v931 = vpop.permute.xlu0 %930
        %933 = vset.pattern.permute.xlu0 4
        %934 = vperm.xlu0 %933, %v177
        %v935 = vpop.permute.xlu0 %934
        %v937 = vperm.slane %v903, 0
        %v938 = vperm.slane %v902, 0
        %v939 = vperm.slane %v901, 0
        %v940 = vperm.slane %v900, 0
        %v941 = vperm.slane %v899, 0
        %v942 = vperm.slane %v898, 0
        %v943 = vperm.slane %v897, 0
        %v944 = vperm.slane %v904, 0
        %v945 = vmul.f32 %v907, %v937
        %v946 = vmul.f32 %v907, %v938
        %v947 = vmul.f32 %v907, %v939
        %v948 = vmul.f32 %v907, %v940
        %v949 = vmul.f32 %v907, %v941
        %v950 = vmul.f32 %v907, %v942
        %v951 = vmul.f32 %v907, %v943
        %v952 = vmul.f32 %v907, %v944
        %v953 = vmul.f32 %v911, %v937
        %v954 = vmul.f32 %v911, %v938
        %v955 = vmul.f32 %v911, %v939
        %v956 = vmul.f32 %v911, %v940
        %v957 = vmul.f32 %v911, %v941
        %v958 = vmul.f32 %v911, %v942
        %v959 = vmul.f32 %v911, %v943
        %v960 = vmul.f32 %v911, %v944
        %v961 = vmul.f32 %v915, %v937
        %v962 = vmul.f32 %v915, %v938
        %v963 = vmul.f32 %v915, %v939
        %v964 = vmul.f32 %v915, %v940
        %v965 = vmul.f32 %v915, %v941
        %v966 = vmul.f32 %v915, %v942
        %v967 = vmul.f32 %v915, %v943
        %v968 = vmul.f32 %v915, %v944
        %v969 = vmul.f32 %v919, %v937
        %v970 = vmul.f32 %v919, %v938
        %v971 = vmul.f32 %v919, %v939
        %v972 = vmul.f32 %v919, %v940
        %v973 = vmul.f32 %v919, %v941
        %v974 = vmul.f32 %v919, %v942
        %v975 = vmul.f32 %v919, %v943
        %v976 = vmul.f32 %v919, %v944
        %v977 = vmul.f32 %v923, %v937
        %v978 = vmul.f32 %v923, %v938
        %v979 = vmul.f32 %v923, %v939
        %v980 = vmul.f32 %v923, %v940
        %v981 = vmul.f32 %v923, %v941
        %v982 = vmul.f32 %v923, %v942
        %v983 = vmul.f32 %v923, %v943
        %v984 = vmul.f32 %v923, %v944
        %v985 = vmul.f32 %v927, %v937
        %v986 = vmul.f32 %v927, %v938
        %v987 = vmul.f32 %v927, %v939
        %v988 = vmul.f32 %v927, %v940
        %v989 = vmul.f32 %v927, %v941
        %v990 = vmul.f32 %v927, %v942
        %v991 = vmul.f32 %v927, %v943
        %v992 = vmul.f32 %v927, %v944
        %v993 = vmul.f32 %v931, %v937
        %v994 = vmul.f32 %v931, %v938
        %v995 = vmul.f32 %v931, %v939
        %v996 = vmul.f32 %v931, %v940
        %v997 = vmul.f32 %v931, %v941
        %v998 = vmul.f32 %v931, %v942
        %v999 = vmul.f32 %v931, %v943
        %v1000 = vmul.f32 %v931, %v944
        %v1001 = vmul.f32 %v935, %v937
        %v1002 = vmul.f32 %v935, %v938
        %v1003 = vmul.f32 %v935, %v939
        %v1004 = vmul.f32 %v935, %v940
        %v1005 = vmul.f32 %v935, %v941
        %v1006 = vmul.f32 %v935, %v942
        %v1007 = vmul.f32 %v935, %v943
        %v1008 = vmul.f32 %v935, %v944
        %v1009 = vadd.f32 %v816, %v945
        %v1010 = vadd.f32 %v817, %v946
        %v1011 = vadd.f32 %v818, %v947
        %v1012 = vadd.f32 %v819, %v948
        %v1013 = vadd.f32 %v820, %v949
        %v1014 = vadd.f32 %v821, %v950
        %v1015 = vadd.f32 %v822, %v951
        %v1016 = vadd.f32 %v823, %v952
        %v1017 = vadd.f32 %v824, %v953
        %v1018 = vadd.f32 %v825, %v954
        %v1019 = vadd.f32 %v826, %v955
        %v1020 = vadd.f32 %v827, %v956
        %v1021 = vadd.f32 %v828, %v957
        %v1022 = vadd.f32 %v829, %v958
        %v1023 = vadd.f32 %v830, %v959
        %v1024 = vadd.f32 %v831, %v960
        %v1025 = vadd.f32 %v832, %v961
        %v1026 = vadd.f32 %v833, %v962
        %v1027 = vadd.f32 %v834, %v963
        %v1028 = vadd.f32 %v835, %v964
        %v1029 = vadd.f32 %v836, %v965
        %v1030 = vadd.f32 %v837, %v966
        %v1031 = vadd.f32 %v838, %v967
        %v1032 = vadd.f32 %v839, %v968
        %v1033 = vadd.f32 %v840, %v969
        %v1034 = vadd.f32 %v841, %v970
        %v1035 = vadd.f32 %v842, %v971
        %v1036 = vadd.f32 %v843, %v972
        %v1037 = vadd.f32 %v844, %v973
        %v1038 = vadd.f32 %v845, %v974
        %v1039 = vadd.f32 %v846, %v975
        %v1040 = vadd.f32 %v847, %v976
        %v1041 = vadd.f32 %v848, %v977
        %v1042 = vadd.f32 %v849, %v978
        %v1043 = vadd.f32 %v850, %v979
        %v1044 = vadd.f32 %v851, %v980
        %v1045 = vadd.f32 %v852, %v981
        %v1046 = vadd.f32 %v853, %v982
        %v1047 = vadd.f32 %v854, %v983
        %v1048 = vadd.f32 %v855, %v984
        %v1049 = vadd.f32 %v856, %v985
        %v1050 = vadd.f32 %v857, %v986
        %v1051 = vadd.f32 %v858, %v987
        %v1052 = vadd.f32 %v859, %v988
        %v1053 = vadd.f32 %v860, %v989
        %v1054 = vadd.f32 %v861, %v990
        %v1055 = vadd.f32 %v862, %v991
        %v1056 = vadd.f32 %v863, %v992
        %v1057 = vadd.f32 %v864, %v993
        %v1058 = vadd.f32 %v865, %v994
        %v1059 = vadd.f32 %v866, %v995
        %v1060 = vadd.f32 %v867, %v996
        %v1061 = vadd.f32 %v868, %v997
        %v1062 = vadd.f32 %v869, %v998
        %v1063 = vadd.f32 %v870, %v999
        %v1064 = vadd.f32 %v871, %v1000
        %v1065 = vadd.f32 %v872, %v1001
        %v1066 = vadd.f32 %v873, %v1002
        %v1067 = vadd.f32 %v874, %v1003
        %v1068 = vadd.f32 %v875, %v1004
        %v1069 = vadd.f32 %v876, %v1005
        %v1070 = vadd.f32 %v877, %v1006
        %v1071 = vadd.f32 %v878, %v1007
        %v1072 = vadd.f32 %v879, %v1008
        %1073 = vrot.lane.b32.xlu0 %v219, 94
        %v1074 = vpop.permute.xlu0 %1073
        %1075 = vrot.lane.b32.xlu0 %v220, 94
        %v1076 = vpop.permute.xlu0 %1075
        %1077 = vrot.lane.b32.xlu0 %v221, 94
        %v1078 = vpop.permute.xlu0 %1077
        %1079 = vrot.lane.b32.xlu0 %v222, 94
        %v1080 = vpop.permute.xlu0 %1079
        %1081 = vrot.lane.b32.xlu0 %v223, 94
        %v1082 = vpop.permute.xlu0 %1081
        %1083 = vrot.lane.b32.xlu0 %v224, 94
        %v1084 = vpop.permute.xlu0 %1083
        %1085 = vrot.lane.b32.xlu0 %v225, 94
        %v1086 = vpop.permute.xlu0 %1085
        %1087 = vrot.lane.b32.xlu0 %v226, 94
        %v1088 = vpop.permute.xlu0 %1087
        %vm1089 = vcmp.lt.s32.totalorder %v316, 94
        %v1090 = vsel %vm1089, %v1086, %v1088
        %v1091 = vsel %vm1089, %v1084, %v1086
        %v1092 = vsel %vm1089, %v1082, %v1084
        %v1093 = vsel %vm1089, %v1080, %v1082
        %v1094 = vsel %vm1089, %v1078, %v1080
        %v1095 = vsel %vm1089, %v1076, %v1078
        %v1096 = vsel %vm1089, %v1074, %v1076
        %v1097 = vsel %vm1089, %v1088, %v1074
        %1098 = vset.pattern.permute.xlu0 5
        %1099 = vperm.xlu0 %1098, %v170
        %v1100 = vpop.permute.xlu0 %1099
        %1102 = vset.pattern.permute.xlu0 5
        %1103 = vperm.xlu0 %1102, %v171
        %v1104 = vpop.permute.xlu0 %1103
        %1106 = vset.pattern.permute.xlu0 5
        %1107 = vperm.xlu0 %1106, %v172
        %v1108 = vpop.permute.xlu0 %1107
        %1110 = vset.pattern.permute.xlu0 5
        %1111 = vperm.xlu0 %1110, %v173
        %v1112 = vpop.permute.xlu0 %1111
        %1114 = vset.pattern.permute.xlu0 5
        %1115 = vperm.xlu0 %1114, %v174
        %v1116 = vpop.permute.xlu0 %1115
        %1118 = vset.pattern.permute.xlu0 5
        %1119 = vperm.xlu0 %1118, %v175
        %v1120 = vpop.permute.xlu0 %1119
        %1122 = vset.pattern.permute.xlu0 5
        %1123 = vperm.xlu0 %1122, %v176
        %v1124 = vpop.permute.xlu0 %1123
        %1126 = vset.pattern.permute.xlu0 5
        %1127 = vperm.xlu0 %1126, %v177
        %v1128 = vpop.permute.xlu0 %1127
        %v1130 = vperm.slane %v1096, 0
        %v1131 = vperm.slane %v1095, 0
        %v1132 = vperm.slane %v1094, 0
        %v1133 = vperm.slane %v1093, 0
        %v1134 = vperm.slane %v1092, 0
        %v1135 = vperm.slane %v1091, 0
        %v1136 = vperm.slane %v1090, 0
        %v1137 = vperm.slane %v1097, 0
        %v1138 = vmul.f32 %v1100, %v1130
        %v1139 = vmul.f32 %v1100, %v1131
        %v1140 = vmul.f32 %v1100, %v1132
        %v1141 = vmul.f32 %v1100, %v1133
        %v1142 = vmul.f32 %v1100, %v1134
        %v1143 = vmul.f32 %v1100, %v1135
        %v1144 = vmul.f32 %v1100, %v1136
        %v1145 = vmul.f32 %v1100, %v1137
        %v1146 = vmul.f32 %v1104, %v1130
        %v1147 = vmul.f32 %v1104, %v1131
        %v1148 = vmul.f32 %v1104, %v1132
        %v1149 = vmul.f32 %v1104, %v1133
        %v1150 = vmul.f32 %v1104, %v1134
        %v1151 = vmul.f32 %v1104, %v1135
        %v1152 = vmul.f32 %v1104, %v1136
        %v1153 = vmul.f32 %v1104, %v1137
        %v1154 = vmul.f32 %v1108, %v1130
        %v1155 = vmul.f32 %v1108, %v1131
        %v1156 = vmul.f32 %v1108, %v1132
        %v1157 = vmul.f32 %v1108, %v1133
        %v1158 = vmul.f32 %v1108, %v1134
        %v1159 = vmul.f32 %v1108, %v1135
        %v1160 = vmul.f32 %v1108, %v1136
        %v1161 = vmul.f32 %v1108, %v1137
        %v1162 = vmul.f32 %v1112, %v1130
        %v1163 = vmul.f32 %v1112, %v1131
        %v1164 = vmul.f32 %v1112, %v1132
        %v1165 = vmul.f32 %v1112, %v1133
        %v1166 = vmul.f32 %v1112, %v1134
        %v1167 = vmul.f32 %v1112, %v1135
        %v1168 = vmul.f32 %v1112, %v1136
        %v1169 = vmul.f32 %v1112, %v1137
        %v1170 = vmul.f32 %v1116, %v1130
        %v1171 = vmul.f32 %v1116, %v1131
        %v1172 = vmul.f32 %v1116, %v1132
        %v1173 = vmul.f32 %v1116, %v1133
        %v1174 = vmul.f32 %v1116, %v1134
        %v1175 = vmul.f32 %v1116, %v1135
        %v1176 = vmul.f32 %v1116, %v1136
        %v1177 = vmul.f32 %v1116, %v1137
        %v1178 = vmul.f32 %v1120, %v1130
        %v1179 = vmul.f32 %v1120, %v1131
        %v1180 = vmul.f32 %v1120, %v1132
        %v1181 = vmul.f32 %v1120, %v1133
        %v1182 = vmul.f32 %v1120, %v1134
        %v1183 = vmul.f32 %v1120, %v1135
        %v1184 = vmul.f32 %v1120, %v1136
        %v1185 = vmul.f32 %v1120, %v1137
        %v1186 = vmul.f32 %v1124, %v1130
        %v1187 = vmul.f32 %v1124, %v1131
        %v1188 = vmul.f32 %v1124, %v1132
        %v1189 = vmul.f32 %v1124, %v1133
        %v1190 = vmul.f32 %v1124, %v1134
        %v1191 = vmul.f32 %v1124, %v1135
        %v1192 = vmul.f32 %v1124, %v1136
        %v1193 = vmul.f32 %v1124, %v1137
        %v1194 = vmul.f32 %v1128, %v1130
        %v1195 = vmul.f32 %v1128, %v1131
        %v1196 = vmul.f32 %v1128, %v1132
        %v1197 = vmul.f32 %v1128, %v1133
        %v1198 = vmul.f32 %v1128, %v1134
        %v1199 = vmul.f32 %v1128, %v1135
        %v1200 = vmul.f32 %v1128, %v1136
        %v1201 = vmul.f32 %v1128, %v1137
        %v1202 = vadd.f32 %v1009, %v1138
        %v1203 = vadd.f32 %v1010, %v1139
        %v1204 = vadd.f32 %v1011, %v1140
        %v1205 = vadd.f32 %v1012, %v1141
        %v1206 = vadd.f32 %v1013, %v1142
        %v1207 = vadd.f32 %v1014, %v1143
        %v1208 = vadd.f32 %v1015, %v1144
        %v1209 = vadd.f32 %v1016, %v1145
        %v1210 = vadd.f32 %v1017, %v1146
        %v1211 = vadd.f32 %v1018, %v1147
        %v1212 = vadd.f32 %v1019, %v1148
        %v1213 = vadd.f32 %v1020, %v1149
        %v1214 = vadd.f32 %v1021, %v1150
        %v1215 = vadd.f32 %v1022, %v1151
        %v1216 = vadd.f32 %v1023, %v1152
        %v1217 = vadd.f32 %v1024, %v1153
        %v1218 = vadd.f32 %v1025, %v1154
        %v1219 = vadd.f32 %v1026, %v1155
        %v1220 = vadd.f32 %v1027, %v1156
        %v1221 = vadd.f32 %v1028, %v1157
        %v1222 = vadd.f32 %v1029, %v1158
        %v1223 = vadd.f32 %v1030, %v1159
        %v1224 = vadd.f32 %v1031, %v1160
        %v1225 = vadd.f32 %v1032, %v1161
        %v1226 = vadd.f32 %v1033, %v1162
        %v1227 = vadd.f32 %v1034, %v1163
        %v1228 = vadd.f32 %v1035, %v1164
        %v1229 = vadd.f32 %v1036, %v1165
        %v1230 = vadd.f32 %v1037, %v1166
        %v1231 = vadd.f32 %v1038, %v1167
        %v1232 = vadd.f32 %v1039, %v1168
        %v1233 = vadd.f32 %v1040, %v1169
        %v1234 = vadd.f32 %v1041, %v1170
        %v1235 = vadd.f32 %v1042, %v1171
        %v1236 = vadd.f32 %v1043, %v1172
        %v1237 = vadd.f32 %v1044, %v1173
        %v1238 = vadd.f32 %v1045, %v1174
        %v1239 = vadd.f32 %v1046, %v1175
        %v1240 = vadd.f32 %v1047, %v1176
        %v1241 = vadd.f32 %v1048, %v1177
        %v1242 = vadd.f32 %v1049, %v1178
        %v1243 = vadd.f32 %v1050, %v1179
        %v1244 = vadd.f32 %v1051, %v1180
        %v1245 = vadd.f32 %v1052, %v1181
        %v1246 = vadd.f32 %v1053, %v1182
        %v1247 = vadd.f32 %v1054, %v1183
        %v1248 = vadd.f32 %v1055, %v1184
        %v1249 = vadd.f32 %v1056, %v1185
        %v1250 = vadd.f32 %v1057, %v1186
        %v1251 = vadd.f32 %v1058, %v1187
        %v1252 = vadd.f32 %v1059, %v1188
        %v1253 = vadd.f32 %v1060, %v1189
        %v1254 = vadd.f32 %v1061, %v1190
        %v1255 = vadd.f32 %v1062, %v1191
        %v1256 = vadd.f32 %v1063, %v1192
        %v1257 = vadd.f32 %v1064, %v1193
        %v1258 = vadd.f32 %v1065, %v1194
        %v1259 = vadd.f32 %v1066, %v1195
        %v1260 = vadd.f32 %v1067, %v1196
        %v1261 = vadd.f32 %v1068, %v1197
        %v1262 = vadd.f32 %v1069, %v1198
        %v1263 = vadd.f32 %v1070, %v1199
        %v1264 = vadd.f32 %v1071, %v1200
        %v1265 = vadd.f32 %v1072, %v1201
        %1266 = vrot.lane.b32.xlu0 %v219, 64
        %v1267 = vpop.permute.xlu0 %1266
        %1268 = vrot.lane.b32.xlu0 %v220, 64
        %v1269 = vpop.permute.xlu0 %1268
        %1270 = vrot.lane.b32.xlu0 %v221, 64
        %v1271 = vpop.permute.xlu0 %1270
        %1272 = vrot.lane.b32.xlu0 %v222, 64
        %v1273 = vpop.permute.xlu0 %1272
        %1274 = vrot.lane.b32.xlu0 %v223, 64
        %v1275 = vpop.permute.xlu0 %1274
        %1276 = vrot.lane.b32.xlu0 %v224, 64
        %v1277 = vpop.permute.xlu0 %1276
        %1278 = vrot.lane.b32.xlu0 %v225, 64
        %v1279 = vpop.permute.xlu0 %1278
        %1280 = vrot.lane.b32.xlu0 %v226, 64
        %v1281 = vpop.permute.xlu0 %1280
        %vm1282 = vcmp.lt.s32.totalorder %v316, 64
        %v1283 = vsel %vm1282, %v1279, %v1281
        %v1284 = vsel %vm1282, %v1277, %v1279
        %v1285 = vsel %vm1282, %v1275, %v1277
        %v1286 = vsel %vm1282, %v1273, %v1275
        %v1287 = vsel %vm1282, %v1271, %v1273
        %v1288 = vsel %vm1282, %v1269, %v1271
        %v1289 = vsel %vm1282, %v1267, %v1269
        %v1290 = vsel %vm1282, %v1281, %v1267
        %1291 = vset.pattern.permute.xlu0 6
        %1292 = vperm.xlu0 %1291, %v170
        %v1293 = vpop.permute.xlu0 %1292
        %1295 = vset.pattern.permute.xlu0 6
        %1296 = vperm.xlu0 %1295, %v171
        %v1297 = vpop.permute.xlu0 %1296
        %1299 = vset.pattern.permute.xlu0 6
        %1300 = vperm.xlu0 %1299, %v172
        %v1301 = vpop.permute.xlu0 %1300
        %1303 = vset.pattern.permute.xlu0 6
        %1304 = vperm.xlu0 %1303, %v173
        %v1305 = vpop.permute.xlu0 %1304
        %1307 = vset.pattern.permute.xlu0 6
        %1308 = vperm.xlu0 %1307, %v174
        %v1309 = vpop.permute.xlu0 %1308
        %1311 = vset.pattern.permute.xlu0 6
        %1312 = vperm.xlu0 %1311, %v175
        %v1313 = vpop.permute.xlu0 %1312
        %1315 = vset.pattern.permute.xlu0 6
        %1316 = vperm.xlu0 %1315, %v176
        %v1317 = vpop.permute.xlu0 %1316
        %1319 = vset.pattern.permute.xlu0 6
        %1320 = vperm.xlu0 %1319, %v177
        %v1321 = vpop.permute.xlu0 %1320
        %v1323 = vperm.slane %v1289, 0
        %v1324 = vperm.slane %v1288, 0
        %v1325 = vperm.slane %v1287, 0
        %v1326 = vperm.slane %v1286, 0
        %v1327 = vperm.slane %v1285, 0
        %v1328 = vperm.slane %v1284, 0
        %v1329 = vperm.slane %v1283, 0
        %v1330 = vperm.slane %v1290, 0
        %v1331 = vmul.f32 %v1293, %v1323
        %v1332 = vmul.f32 %v1293, %v1324
        %v1333 = vmul.f32 %v1293, %v1325
        %v1334 = vmul.f32 %v1293, %v1326
        %v1335 = vmul.f32 %v1293, %v1327
        %v1336 = vmul.f32 %v1293, %v1328
        %v1337 = vmul.f32 %v1293, %v1329
        %v1338 = vmul.f32 %v1293, %v1330
        %v1339 = vmul.f32 %v1297, %v1323
        %v1340 = vmul.f32 %v1297, %v1324
        %v1341 = vmul.f32 %v1297, %v1325
        %v1342 = vmul.f32 %v1297, %v1326
        %v1343 = vmul.f32 %v1297, %v1327
        %v1344 = vmul.f32 %v1297, %v1328
        %v1345 = vmul.f32 %v1297, %v1329
        %v1346 = vmul.f32 %v1297, %v1330
        %v1347 = vmul.f32 %v1301, %v1323
        %v1348 = vmul.f32 %v1301, %v1324
        %v1349 = vmul.f32 %v1301, %v1325
        %v1350 = vmul.f32 %v1301, %v1326
        %v1351 = vmul.f32 %v1301, %v1327
        %v1352 = vmul.f32 %v1301, %v1328
        %v1353 = vmul.f32 %v1301, %v1329
        %v1354 = vmul.f32 %v1301, %v1330
        %v1355 = vmul.f32 %v1305, %v1323
        %v1356 = vmul.f32 %v1305, %v1324
        %v1357 = vmul.f32 %v1305, %v1325
        %v1358 = vmul.f32 %v1305, %v1326
        %v1359 = vmul.f32 %v1305, %v1327
        %v1360 = vmul.f32 %v1305, %v1328
        %v1361 = vmul.f32 %v1305, %v1329
        %v1362 = vmul.f32 %v1305, %v1330
        %v1363 = vmul.f32 %v1309, %v1323
        %v1364 = vmul.f32 %v1309, %v1324
        %v1365 = vmul.f32 %v1309, %v1325
        %v1366 = vmul.f32 %v1309, %v1326
        %v1367 = vmul.f32 %v1309, %v1327
        %v1368 = vmul.f32 %v1309, %v1328
        %v1369 = vmul.f32 %v1309, %v1329
        %v1370 = vmul.f32 %v1309, %v1330
        %v1371 = vmul.f32 %v1313, %v1323
        %v1372 = vmul.f32 %v1313, %v1324
        %v1373 = vmul.f32 %v1313, %v1325
        %v1374 = vmul.f32 %v1313, %v1326
        %v1375 = vmul.f32 %v1313, %v1327
        %v1376 = vmul.f32 %v1313, %v1328
        %v1377 = vmul.f32 %v1313, %v1329
        %v1378 = vmul.f32 %v1313, %v1330
        %v1379 = vmul.f32 %v1317, %v1323
        %v1380 = vmul.f32 %v1317, %v1324
        %v1381 = vmul.f32 %v1317, %v1325
        %v1382 = vmul.f32 %v1317, %v1326
        %v1383 = vmul.f32 %v1317, %v1327
        %v1384 = vmul.f32 %v1317, %v1328
        %v1385 = vmul.f32 %v1317, %v1329
        %v1386 = vmul.f32 %v1317, %v1330
        %v1387 = vmul.f32 %v1321, %v1323
        %v1388 = vmul.f32 %v1321, %v1324
        %v1389 = vmul.f32 %v1321, %v1325
        %v1390 = vmul.f32 %v1321, %v1326
        %v1391 = vmul.f32 %v1321, %v1327
        %v1392 = vmul.f32 %v1321, %v1328
        %v1393 = vmul.f32 %v1321, %v1329
        %v1394 = vmul.f32 %v1321, %v1330
        %v1395 = vadd.f32 %v1202, %v1331
        %v1396 = vadd.f32 %v1203, %v1332
        %v1397 = vadd.f32 %v1204, %v1333
        %v1398 = vadd.f32 %v1205, %v1334
        %v1399 = vadd.f32 %v1206, %v1335
        %v1400 = vadd.f32 %v1207, %v1336
        %v1401 = vadd.f32 %v1208, %v1337
        %v1402 = vadd.f32 %v1209, %v1338
        %v1403 = vadd.f32 %v1210, %v1339
        %v1404 = vadd.f32 %v1211, %v1340
        %v1405 = vadd.f32 %v1212, %v1341
        %v1406 = vadd.f32 %v1213, %v1342
        %v1407 = vadd.f32 %v1214, %v1343
        %v1408 = vadd.f32 %v1215, %v1344
        %v1409 = vadd.f32 %v1216, %v1345
        %v1410 = vadd.f32 %v1217, %v1346
        %v1411 = vadd.f32 %v1218, %v1347
        %v1412 = vadd.f32 %v1219, %v1348
        %v1413 = vadd.f32 %v1220, %v1349
        %v1414 = vadd.f32 %v1221, %v1350
        %v1415 = vadd.f32 %v1222, %v1351
        %v1416 = vadd.f32 %v1223, %v1352
        %v1417 = vadd.f32 %v1224, %v1353
        %v1418 = vadd.f32 %v1225, %v1354
        %v1419 = vadd.f32 %v1226, %v1355
        %v1420 = vadd.f32 %v1227, %v1356
        %v1421 = vadd.f32 %v1228, %v1357
        %v1422 = vadd.f32 %v1229, %v1358
        %v1423 = vadd.f32 %v1230, %v1359
        %v1424 = vadd.f32 %v1231, %v1360
        %v1425 = vadd.f32 %v1232, %v1361
        %v1426 = vadd.f32 %v1233, %v1362
        %v1427 = vadd.f32 %v1234, %v1363
        %v1428 = vadd.f32 %v1235, %v1364
        %v1429 = vadd.f32 %v1236, %v1365
        %v1430 = vadd.f32 %v1237, %v1366
        %v1431 = vadd.f32 %v1238, %v1367
        %v1432 = vadd.f32 %v1239, %v1368
        %v1433 = vadd.f32 %v1240, %v1369
        %v1434 = vadd.f32 %v1241, %v1370
        %v1435 = vadd.f32 %v1242, %v1371
        %v1436 = vadd.f32 %v1243, %v1372
        %v1437 = vadd.f32 %v1244, %v1373
        %v1438 = vadd.f32 %v1245, %v1374
        %v1439 = vadd.f32 %v1246, %v1375
        %v1440 = vadd.f32 %v1247, %v1376
        %v1441 = vadd.f32 %v1248, %v1377
        %v1442 = vadd.f32 %v1249, %v1378
        %v1443 = vadd.f32 %v1250, %v1379
        %v1444 = vadd.f32 %v1251, %v1380
        %v1445 = vadd.f32 %v1252, %v1381
        %v1446 = vadd.f32 %v1253, %v1382
        %v1447 = vadd.f32 %v1254, %v1383
        %v1448 = vadd.f32 %v1255, %v1384
        %v1449 = vadd.f32 %v1256, %v1385
        %v1450 = vadd.f32 %v1257, %v1386
        %v1451 = vadd.f32 %v1258, %v1387
        %v1452 = vadd.f32 %v1259, %v1388
        %v1453 = vadd.f32 %v1260, %v1389
        %v1454 = vadd.f32 %v1261, %v1390
        %v1455 = vadd.f32 %v1262, %v1391
        %v1456 = vadd.f32 %v1263, %v1392
        %v1457 = vadd.f32 %v1264, %v1393
        %v1458 = vadd.f32 %v1265, %v1394
        %1459 = vrot.lane.b32.xlu0 %v219, 63
        %v1460 = vpop.permute.xlu0 %1459
        %1461 = vrot.lane.b32.xlu0 %v220, 63
        %v1462 = vpop.permute.xlu0 %1461
        %1463 = vrot.lane.b32.xlu0 %v221, 63
        %v1464 = vpop.permute.xlu0 %1463
        %1465 = vrot.lane.b32.xlu0 %v222, 63
        %v1466 = vpop.permute.xlu0 %1465
        %1467 = vrot.lane.b32.xlu0 %v223, 63
        %v1468 = vpop.permute.xlu0 %1467
        %1469 = vrot.lane.b32.xlu0 %v224, 63
        %v1470 = vpop.permute.xlu0 %1469
        %1471 = vrot.lane.b32.xlu0 %v225, 63
        %v1472 = vpop.permute.xlu0 %1471
        %1473 = vrot.lane.b32.xlu0 %v226, 63
        %v1474 = vpop.permute.xlu0 %1473
        %vm1475 = vcmp.lt.s32.totalorder %v316, 63
        %v1476 = vsel %vm1475, %v1472, %v1474
        %v1477 = vsel %vm1475, %v1470, %v1472
        %v1478 = vsel %vm1475, %v1468, %v1470
        %v1479 = vsel %vm1475, %v1466, %v1468
        %v1480 = vsel %vm1475, %v1464, %v1466
        %v1481 = vsel %vm1475, %v1462, %v1464
        %v1482 = vsel %vm1475, %v1460, %v1462
        %v1483 = vsel %vm1475, %v1474, %v1460
        %1484 = vset.pattern.permute.xlu0 7
        %1485 = vperm.xlu0 %1484, %v170
        %v1486 = vpop.permute.xlu0 %1485
        %1488 = vset.pattern.permute.xlu0 7
        %1489 = vperm.xlu0 %1488, %v171
        %v1490 = vpop.permute.xlu0 %1489
        %1492 = vset.pattern.permute.xlu0 7
        %1493 = vperm.xlu0 %1492, %v172
        %v1494 = vpop.permute.xlu0 %1493
        %1496 = vset.pattern.permute.xlu0 7
        %1497 = vperm.xlu0 %1496, %v173
        %v1498 = vpop.permute.xlu0 %1497
        %1500 = vset.pattern.permute.xlu0 7
        %1501 = vperm.xlu0 %1500, %v174
        %v1502 = vpop.permute.xlu0 %1501
        %1504 = vset.pattern.permute.xlu0 7
        %1505 = vperm.xlu0 %1504, %v175
        %v1506 = vpop.permute.xlu0 %1505
        %1508 = vset.pattern.permute.xlu0 7
        %1509 = vperm.xlu0 %1508, %v176
        %v1510 = vpop.permute.xlu0 %1509
        %1512 = vset.pattern.permute.xlu0 7
        %1513 = vperm.xlu0 %1512, %v177
        %v1514 = vpop.permute.xlu0 %1513
        %v1516 = vperm.slane %v1482, 0
        %v1517 = vperm.slane %v1481, 0
        %v1518 = vperm.slane %v1480, 0
        %v1519 = vperm.slane %v1479, 0
        %v1520 = vperm.slane %v1478, 0
        %v1521 = vperm.slane %v1477, 0
        %v1522 = vperm.slane %v1476, 0
        %v1523 = vperm.slane %v1483, 0
        %v1524 = vmul.f32 %v1486, %v1516
        %v1525 = vmul.f32 %v1486, %v1517
        %v1526 = vmul.f32 %v1486, %v1518
        %v1527 = vmul.f32 %v1486, %v1519
        %v1528 = vmul.f32 %v1486, %v1520
        %v1529 = vmul.f32 %v1486, %v1521
        %v1530 = vmul.f32 %v1486, %v1522
        %v1531 = vmul.f32 %v1486, %v1523
        %v1532 = vmul.f32 %v1490, %v1516
        %v1533 = vmul.f32 %v1490, %v1517
        %v1534 = vmul.f32 %v1490, %v1518
        %v1535 = vmul.f32 %v1490, %v1519
        %v1536 = vmul.f32 %v1490, %v1520
        %v1537 = vmul.f32 %v1490, %v1521
        %v1538 = vmul.f32 %v1490, %v1522
        %v1539 = vmul.f32 %v1490, %v1523
        %v1540 = vmul.f32 %v1494, %v1516
        %v1541 = vmul.f32 %v1494, %v1517
        %v1542 = vmul.f32 %v1494, %v1518
        %v1543 = vmul.f32 %v1494, %v1519
        %v1544 = vmul.f32 %v1494, %v1520
        %v1545 = vmul.f32 %v1494, %v1521
        %v1546 = vmul.f32 %v1494, %v1522
        %v1547 = vmul.f32 %v1494, %v1523
        %v1548 = vmul.f32 %v1498, %v1516
        %v1549 = vmul.f32 %v1498, %v1517
        %v1550 = vmul.f32 %v1498, %v1518
        %v1551 = vmul.f32 %v1498, %v1519
        %v1552 = vmul.f32 %v1498, %v1520
        %v1553 = vmul.f32 %v1498, %v1521
        %v1554 = vmul.f32 %v1498, %v1522
        %v1555 = vmul.f32 %v1498, %v1523
        %v1556 = vmul.f32 %v1502, %v1516
        %v1557 = vmul.f32 %v1502, %v1517
        %v1558 = vmul.f32 %v1502, %v1518
        %v1559 = vmul.f32 %v1502, %v1519
        %v1560 = vmul.f32 %v1502, %v1520
        %v1561 = vmul.f32 %v1502, %v1521
        %v1562 = vmul.f32 %v1502, %v1522
        %v1563 = vmul.f32 %v1502, %v1523
        %v1564 = vmul.f32 %v1506, %v1516
        %v1565 = vmul.f32 %v1506, %v1517
        %v1566 = vmul.f32 %v1506, %v1518
        %v1567 = vmul.f32 %v1506, %v1519
        %v1568 = vmul.f32 %v1506, %v1520
        %v1569 = vmul.f32 %v1506, %v1521
        %v1570 = vmul.f32 %v1506, %v1522
        %v1571 = vmul.f32 %v1506, %v1523
        %v1572 = vmul.f32 %v1510, %v1516
        %v1573 = vmul.f32 %v1510, %v1517
        %v1574 = vmul.f32 %v1510, %v1518
        %v1575 = vmul.f32 %v1510, %v1519
        %v1576 = vmul.f32 %v1510, %v1520
        %v1577 = vmul.f32 %v1510, %v1521
        %v1578 = vmul.f32 %v1510, %v1522
        %v1579 = vmul.f32 %v1510, %v1523
        %v1580 = vmul.f32 %v1514, %v1516
        %v1581 = vmul.f32 %v1514, %v1517
        %v1582 = vmul.f32 %v1514, %v1518
        %v1583 = vmul.f32 %v1514, %v1519
        %v1584 = vmul.f32 %v1514, %v1520
        %v1585 = vmul.f32 %v1514, %v1521
        %v1586 = vmul.f32 %v1514, %v1522
        %v1587 = vmul.f32 %v1514, %v1523
        %v1588 = vadd.f32 %v1395, %v1524
        %v1589 = vadd.f32 %v1396, %v1525
        %v1590 = vadd.f32 %v1397, %v1526
        %v1591 = vadd.f32 %v1398, %v1527
        %v1592 = vadd.f32 %v1399, %v1528
        %v1593 = vadd.f32 %v1400, %v1529
        %v1594 = vadd.f32 %v1401, %v1530
        %v1595 = vadd.f32 %v1402, %v1531
        %v1596 = vadd.f32 %v1403, %v1532
        %v1597 = vadd.f32 %v1404, %v1533
        %v1598 = vadd.f32 %v1405, %v1534
        %v1599 = vadd.f32 %v1406, %v1535
        %v1600 = vadd.f32 %v1407, %v1536
        %v1601 = vadd.f32 %v1408, %v1537
        %v1602 = vadd.f32 %v1409, %v1538
        %v1603 = vadd.f32 %v1410, %v1539
        %v1604 = vadd.f32 %v1411, %v1540
        %v1605 = vadd.f32 %v1412, %v1541
        %v1606 = vadd.f32 %v1413, %v1542
        %v1607 = vadd.f32 %v1414, %v1543
        %v1608 = vadd.f32 %v1415, %v1544
        %v1609 = vadd.f32 %v1416, %v1545
        %v1610 = vadd.f32 %v1417, %v1546
        %v1611 = vadd.f32 %v1418, %v1547
        %v1612 = vadd.f32 %v1419, %v1548
        %v1613 = vadd.f32 %v1420, %v1549
        %v1614 = vadd.f32 %v1421, %v1550
        %v1615 = vadd.f32 %v1422, %v1551
        %v1616 = vadd.f32 %v1423, %v1552
        %v1617 = vadd.f32 %v1424, %v1553
        %v1618 = vadd.f32 %v1425, %v1554
        %v1619 = vadd.f32 %v1426, %v1555
        %v1620 = vadd.f32 %v1427, %v1556
        %v1621 = vadd.f32 %v1428, %v1557
        %v1622 = vadd.f32 %v1429, %v1558
        %v1623 = vadd.f32 %v1430, %v1559
        %v1624 = vadd.f32 %v1431, %v1560
        %v1625 = vadd.f32 %v1432, %v1561
        %v1626 = vadd.f32 %v1433, %v1562
        %v1627 = vadd.f32 %v1434, %v1563
        %v1628 = vadd.f32 %v1435, %v1564
        %v1629 = vadd.f32 %v1436, %v1565
        %v1630 = vadd.f32 %v1437, %v1566
        %v1631 = vadd.f32 %v1438, %v1567
        %v1632 = vadd.f32 %v1439, %v1568
        %v1633 = vadd.f32 %v1440, %v1569
        %v1634 = vadd.f32 %v1441, %v1570
        %v1635 = vadd.f32 %v1442, %v1571
        %v1636 = vadd.f32 %v1443, %v1572
        %v1637 = vadd.f32 %v1444, %v1573
        %v1638 = vadd.f32 %v1445, %v1574
        %v1639 = vadd.f32 %v1446, %v1575
        %v1640 = vadd.f32 %v1447, %v1576
        %v1641 = vadd.f32 %v1448, %v1577
        %v1642 = vadd.f32 %v1449, %v1578
        %v1643 = vadd.f32 %v1450, %v1579
        %v1644 = vadd.f32 %v1451, %v1580
        %v1645 = vadd.f32 %v1452, %v1581
        %v1646 = vadd.f32 %v1453, %v1582
        %v1647 = vadd.f32 %v1454, %v1583
        %v1648 = vadd.f32 %v1455, %v1584
        %v1649 = vadd.f32 %v1456, %v1585
        %v1650 = vadd.f32 %v1457, %v1586
        %v1651 = vadd.f32 %v1458, %v1587
        %1652 = vrot.lane.b32.xlu0 %v219, 62
        %v1653 = vpop.permute.xlu0 %1652
        %1654 = vrot.lane.b32.xlu0 %v220, 62
        %v1655 = vpop.permute.xlu0 %1654
        %1656 = vrot.lane.b32.xlu0 %v221, 62
        %v1657 = vpop.permute.xlu0 %1656
        %1658 = vrot.lane.b32.xlu0 %v222, 62
        %v1659 = vpop.permute.xlu0 %1658
        %1660 = vrot.lane.b32.xlu0 %v223, 62
        %v1661 = vpop.permute.xlu0 %1660
        %1662 = vrot.lane.b32.xlu0 %v224, 62
        %v1663 = vpop.permute.xlu0 %1662
        %1664 = vrot.lane.b32.xlu0 %v225, 62
        %v1665 = vpop.permute.xlu0 %1664
        %1666 = vrot.lane.b32.xlu0 %v226, 62
        %v1667 = vpop.permute.xlu0 %1666
        %vm1668 = vcmp.lt.s32.totalorder %v316, 62
        %v1669 = vsel %vm1668, %v1665, %v1667
        %v1670 = vsel %vm1668, %v1663, %v1665
        %v1671 = vsel %vm1668, %v1661, %v1663
        %v1672 = vsel %vm1668, %v1659, %v1661
        %v1673 = vsel %vm1668, %v1657, %v1659
        %v1674 = vsel %vm1668, %v1655, %v1657
        %v1675 = vsel %vm1668, %v1653, %v1655
        %v1676 = vsel %vm1668, %v1667, %v1653
        %1677 = vset.pattern.permute.xlu0 8
        %1678 = vperm.xlu0 %1677, %v170
        %v1679 = vpop.permute.xlu0 %1678
        %1681 = vset.pattern.permute.xlu0 8
        %1682 = vperm.xlu0 %1681, %v171
        %v1683 = vpop.permute.xlu0 %1682
        %1685 = vset.pattern.permute.xlu0 8
        %1686 = vperm.xlu0 %1685, %v172
        %v1687 = vpop.permute.xlu0 %1686
        %1689 = vset.pattern.permute.xlu0 8
        %1690 = vperm.xlu0 %1689, %v173
        %v1691 = vpop.permute.xlu0 %1690
        %1693 = vset.pattern.permute.xlu0 8
        %1694 = vperm.xlu0 %1693, %v174
        %v1695 = vpop.permute.xlu0 %1694
        %1697 = vset.pattern.permute.xlu0 8
        %1698 = vperm.xlu0 %1697, %v175
        %v1699 = vpop.permute.xlu0 %1698
        %1701 = vset.pattern.permute.xlu0 8
        %1702 = vperm.xlu0 %1701, %v176
        %v1703 = vpop.permute.xlu0 %1702
        %1705 = vset.pattern.permute.xlu0 8
        %1706 = vperm.xlu0 %1705, %v177
        %v1707 = vpop.permute.xlu0 %1706
        %v1709 = vperm.slane %v1675, 0
        %v1710 = vperm.slane %v1674, 0
        %v1711 = vperm.slane %v1673, 0
        %v1712 = vperm.slane %v1672, 0
        %v1713 = vperm.slane %v1671, 0
        %v1714 = vperm.slane %v1670, 0
        %v1715 = vperm.slane %v1669, 0
        %v1716 = vperm.slane %v1676, 0
        %v1717 = vmul.f32 %v1679, %v1709
        %v1718 = vmul.f32 %v1679, %v1710
        %v1719 = vmul.f32 %v1679, %v1711
        %v1720 = vmul.f32 %v1679, %v1712
        %v1721 = vmul.f32 %v1679, %v1713
        %v1722 = vmul.f32 %v1679, %v1714
        %v1723 = vmul.f32 %v1679, %v1715
        %v1724 = vmul.f32 %v1679, %v1716
        %v1725 = vmul.f32 %v1683, %v1709
        %v1726 = vmul.f32 %v1683, %v1710
        %v1727 = vmul.f32 %v1683, %v1711
        %v1728 = vmul.f32 %v1683, %v1712
        %v1729 = vmul.f32 %v1683, %v1713
        %v1730 = vmul.f32 %v1683, %v1714
        %v1731 = vmul.f32 %v1683, %v1715
        %v1732 = vmul.f32 %v1683, %v1716
        %v1733 = vmul.f32 %v1687, %v1709
        %v1734 = vmul.f32 %v1687, %v1710
        %v1735 = vmul.f32 %v1687, %v1711
        %v1736 = vmul.f32 %v1687, %v1712
        %v1737 = vmul.f32 %v1687, %v1713
        %v1738 = vmul.f32 %v1687, %v1714
        %v1739 = vmul.f32 %v1687, %v1715
        %v1740 = vmul.f32 %v1687, %v1716
        %v1741 = vmul.f32 %v1691, %v1709
        %v1742 = vmul.f32 %v1691, %v1710
        %v1743 = vmul.f32 %v1691, %v1711
        %v1744 = vmul.f32 %v1691, %v1712
        %v1745 = vmul.f32 %v1691, %v1713
        %v1746 = vmul.f32 %v1691, %v1714
        %v1747 = vmul.f32 %v1691, %v1715
        %v1748 = vmul.f32 %v1691, %v1716
        %v1749 = vmul.f32 %v1695, %v1709
        %v1750 = vmul.f32 %v1695, %v1710
        %v1751 = vmul.f32 %v1695, %v1711
        %v1752 = vmul.f32 %v1695, %v1712
        %v1753 = vmul.f32 %v1695, %v1713
        %v1754 = vmul.f32 %v1695, %v1714
        %v1755 = vmul.f32 %v1695, %v1715
        %v1756 = vmul.f32 %v1695, %v1716
        %v1757 = vmul.f32 %v1699, %v1709
        %v1758 = vmul.f32 %v1699, %v1710
        %v1759 = vmul.f32 %v1699, %v1711
        %v1760 = vmul.f32 %v1699, %v1712
        %v1761 = vmul.f32 %v1699, %v1713
        %v1762 = vmul.f32 %v1699, %v1714
        %v1763 = vmul.f32 %v1699, %v1715
        %v1764 = vmul.f32 %v1699, %v1716
        %v1765 = vmul.f32 %v1703, %v1709
        %v1766 = vmul.f32 %v1703, %v1710
        %v1767 = vmul.f32 %v1703, %v1711
        %v1768 = vmul.f32 %v1703, %v1712
        %v1769 = vmul.f32 %v1703, %v1713
        %v1770 = vmul.f32 %v1703, %v1714
        %v1771 = vmul.f32 %v1703, %v1715
        %v1772 = vmul.f32 %v1703, %v1716
        %v1773 = vmul.f32 %v1707, %v1709
        %v1774 = vmul.f32 %v1707, %v1710
        %v1775 = vmul.f32 %v1707, %v1711
        %v1776 = vmul.f32 %v1707, %v1712
        %v1777 = vmul.f32 %v1707, %v1713
        %v1778 = vmul.f32 %v1707, %v1714
        %v1779 = vmul.f32 %v1707, %v1715
        %v1780 = vmul.f32 %v1707, %v1716
        %v1781 = vadd.f32 %v1588, %v1717
        %v1782 = vadd.f32 %v1589, %v1718
        %v1783 = vadd.f32 %v1590, %v1719
        %v1784 = vadd.f32 %v1591, %v1720
        %v1785 = vadd.f32 %v1592, %v1721
        %v1786 = vadd.f32 %v1593, %v1722
        %v1787 = vadd.f32 %v1594, %v1723
        %v1788 = vadd.f32 %v1595, %v1724
        %v1789 = vadd.f32 %v1596, %v1725
        %v1790 = vadd.f32 %v1597, %v1726
        %v1791 = vadd.f32 %v1598, %v1727
        %v1792 = vadd.f32 %v1599, %v1728
        %v1793 = vadd.f32 %v1600, %v1729
        %v1794 = vadd.f32 %v1601, %v1730
        %v1795 = vadd.f32 %v1602, %v1731
        %v1796 = vadd.f32 %v1603, %v1732
        %v1797 = vadd.f32 %v1604, %v1733
        %v1798 = vadd.f32 %v1605, %v1734
        %v1799 = vadd.f32 %v1606, %v1735
        %v1800 = vadd.f32 %v1607, %v1736
        %v1801 = vadd.f32 %v1608, %v1737
        %v1802 = vadd.f32 %v1609, %v1738
        %v1803 = vadd.f32 %v1610, %v1739
        %v1804 = vadd.f32 %v1611, %v1740
        %v1805 = vadd.f32 %v1612, %v1741
        %v1806 = vadd.f32 %v1613, %v1742
        %v1807 = vadd.f32 %v1614, %v1743
        %v1808 = vadd.f32 %v1615, %v1744
        %v1809 = vadd.f32 %v1616, %v1745
        %v1810 = vadd.f32 %v1617, %v1746
        %v1811 = vadd.f32 %v1618, %v1747
        %v1812 = vadd.f32 %v1619, %v1748
        %v1813 = vadd.f32 %v1620, %v1749
        %v1814 = vadd.f32 %v1621, %v1750
        %v1815 = vadd.f32 %v1622, %v1751
        %v1816 = vadd.f32 %v1623, %v1752
        %v1817 = vadd.f32 %v1624, %v1753
        %v1818 = vadd.f32 %v1625, %v1754
        %v1819 = vadd.f32 %v1626, %v1755
        %v1820 = vadd.f32 %v1627, %v1756
        %v1821 = vadd.f32 %v1628, %v1757
        %v1822 = vadd.f32 %v1629, %v1758
        %v1823 = vadd.f32 %v1630, %v1759
        %v1824 = vadd.f32 %v1631, %v1760
        %v1825 = vadd.f32 %v1632, %v1761
        %v1826 = vadd.f32 %v1633, %v1762
        %v1827 = vadd.f32 %v1634, %v1763
        %v1828 = vadd.f32 %v1635, %v1764
        %v1829 = vadd.f32 %v1636, %v1765
        %v1830 = vadd.f32 %v1637, %v1766
        %v1831 = vadd.f32 %v1638, %v1767
        %v1832 = vadd.f32 %v1639, %v1768
        %v1833 = vadd.f32 %v1640, %v1769
        %v1834 = vadd.f32 %v1641, %v1770
        %v1835 = vadd.f32 %v1642, %v1771
        %v1836 = vadd.f32 %v1643, %v1772
        %v1837 = vadd.f32 %v1644, %v1773
        %v1838 = vadd.f32 %v1645, %v1774
        %v1839 = vadd.f32 %v1646, %v1775
        %v1840 = vadd.f32 %v1647, %v1776
        %v1841 = vadd.f32 %v1648, %v1777
        %v1842 = vadd.f32 %v1649, %v1778
        %v1843 = vadd.f32 %v1650, %v1779
        %v1844 = vadd.f32 %v1651, %v1780
        %v1845 = vld [vmem:[%s2] sm:$0xff]
        %v1846 = vld [vmem:[%s2 + $0x8] sm:$0xff]
        %v1847 = vld [vmem:[%s2 + $0x10] sm:$0xff]
        %v1848 = vld [vmem:[%s2 + $0x18] sm:$0xff]
        %v1849 = vld [vmem:[%s2 + $0x20] sm:$0xff]
        %v1850 = vld [vmem:[%s2 + $0x28] sm:$0xff]
        %v1851 = vld [vmem:[%s2 + $0x30] sm:$0xff]
        %v1852 = vld [vmem:[%s2 + $0x38] sm:$0xff]
        %1854 = vset.pattern.permute.xlu0 0
        %1855 = vperm.xlu0 %1854, %v1845
        %v1856 = vpop.permute.xlu0 %1855
        %1859 = vset.pattern.permute.xlu0 0
        %1860 = vperm.xlu0 %1859, %v1846
        %v1861 = vpop.permute.xlu0 %1860
        %1864 = vset.pattern.permute.xlu0 0
        %1865 = vperm.xlu0 %1864, %v1847
        %v1866 = vpop.permute.xlu0 %1865
        %1869 = vset.pattern.permute.xlu0 0
        %1870 = vperm.xlu0 %1869, %v1848
        %v1871 = vpop.permute.xlu0 %1870
        %1874 = vset.pattern.permute.xlu0 0
        %1875 = vperm.xlu0 %1874, %v1849
        %v1876 = vpop.permute.xlu0 %1875
        %1879 = vset.pattern.permute.xlu0 0
        %1880 = vperm.xlu0 %1879, %v1850
        %v1881 = vpop.permute.xlu0 %1880
        %1884 = vset.pattern.permute.xlu0 0
        %1885 = vperm.xlu0 %1884, %v1851
        %v1886 = vpop.permute.xlu0 %1885
        %1889 = vset.pattern.permute.xlu0 0
        %1890 = vperm.xlu0 %1889, %v1852
        %v1891 = vpop.permute.xlu0 %1890
        %v1893 = vadd.f32 %v1781, %v1856
        %v1894 = vadd.f32 %v1782, %v1856
        %v1895 = vadd.f32 %v1783, %v1856
        %v1896 = vadd.f32 %v1784, %v1856
        %v1897 = vadd.f32 %v1785, %v1856
        %v1898 = vadd.f32 %v1786, %v1856
        %v1899 = vadd.f32 %v1787, %v1856
        %v1900 = vadd.f32 %v1788, %v1856
        %v1901 = vadd.f32 %v1789, %v1861
        %v1902 = vadd.f32 %v1790, %v1861
        %v1903 = vadd.f32 %v1791, %v1861
        %v1904 = vadd.f32 %v1792, %v1861
        %v1905 = vadd.f32 %v1793, %v1861
        %v1906 = vadd.f32 %v1794, %v1861
        %v1907 = vadd.f32 %v1795, %v1861
        %v1908 = vadd.f32 %v1796, %v1861
        %v1909 = vadd.f32 %v1797, %v1866
        %v1910 = vadd.f32 %v1798, %v1866
        %v1911 = vadd.f32 %v1799, %v1866
        %v1912 = vadd.f32 %v1800, %v1866
        %v1913 = vadd.f32 %v1801, %v1866
        %v1914 = vadd.f32 %v1802, %v1866
        %v1915 = vadd.f32 %v1803, %v1866
        %v1916 = vadd.f32 %v1804, %v1866
        %v1917 = vadd.f32 %v1805, %v1871
        %v1918 = vadd.f32 %v1806, %v1871
        %v1919 = vadd.f32 %v1807, %v1871
        %v1920 = vadd.f32 %v1808, %v1871
        %v1921 = vadd.f32 %v1809, %v1871
        %v1922 = vadd.f32 %v1810, %v1871
        %v1923 = vadd.f32 %v1811, %v1871
        %v1924 = vadd.f32 %v1812, %v1871
        %v1925 = vadd.f32 %v1813, %v1876
        %v1926 = vadd.f32 %v1814, %v1876
        %v1927 = vadd.f32 %v1815, %v1876
        %v1928 = vadd.f32 %v1816, %v1876
        %v1929 = vadd.f32 %v1817, %v1876
        %v1930 = vadd.f32 %v1818, %v1876
        %v1931 = vadd.f32 %v1819, %v1876
        %v1932 = vadd.f32 %v1820, %v1876
        %v1933 = vadd.f32 %v1821, %v1881
        %v1934 = vadd.f32 %v1822, %v1881
        %v1935 = vadd.f32 %v1823, %v1881
        %v1936 = vadd.f32 %v1824, %v1881
        %v1937 = vadd.f32 %v1825, %v1881
        %v1938 = vadd.f32 %v1826, %v1881
        %v1939 = vadd.f32 %v1827, %v1881
        %v1940 = vadd.f32 %v1828, %v1881
        %v1941 = vadd.f32 %v1829, %v1886
        %v1942 = vadd.f32 %v1830, %v1886
        %v1943 = vadd.f32 %v1831, %v1886
        %v1944 = vadd.f32 %v1832, %v1886
        %v1945 = vadd.f32 %v1833, %v1886
        %v1946 = vadd.f32 %v1834, %v1886
        %v1947 = vadd.f32 %v1835, %v1886
        %v1948 = vadd.f32 %v1836, %v1886
        %v1949 = vadd.f32 %v1837, %v1891
        %v1950 = vadd.f32 %v1838, %v1891
        %v1951 = vadd.f32 %v1839, %v1891
        %v1952 = vadd.f32 %v1840, %v1891
        %v1953 = vadd.f32 %v1841, %v1891
        %v1954 = vadd.f32 %v1842, %v1891
        %v1955 = vadd.f32 %v1843, %v1891
        %v1956 = vadd.f32 %v1844, %v1891
        %v1957 = vmax.f32 %v1893, 0.0
        %v1958 = vmax.f32 %v1894, 0.0
        %v1959 = vmax.f32 %v1895, 0.0
        %v1960 = vmax.f32 %v1896, 0.0
        %v1961 = vmax.f32 %v1897, 0.0
        %v1962 = vmax.f32 %v1898, 0.0
        %v1963 = vmax.f32 %v1899, 0.0
        %v1964 = vmax.f32 %v1900, 0.0
        %v1965 = vmax.f32 %v1901, 0.0
        %v1966 = vmax.f32 %v1902, 0.0
        %v1967 = vmax.f32 %v1903, 0.0
        %v1968 = vmax.f32 %v1904, 0.0
        %v1969 = vmax.f32 %v1905, 0.0
        %v1970 = vmax.f32 %v1906, 0.0
        %v1971 = vmax.f32 %v1907, 0.0
        %v1972 = vmax.f32 %v1908, 0.0
        %v1973 = vmax.f32 %v1909, 0.0
        %v1974 = vmax.f32 %v1910, 0.0
        %v1975 = vmax.f32 %v1911, 0.0
        %v1976 = vmax.f32 %v1912, 0.0
        %v1977 = vmax.f32 %v1913, 0.0
        %v1978 = vmax.f32 %v1914, 0.0
        %v1979 = vmax.f32 %v1915, 0.0
        %v1980 = vmax.f32 %v1916, 0.0
        %v1981 = vmax.f32 %v1917, 0.0
        %v1982 = vmax.f32 %v1918, 0.0
        %v1983 = vmax.f32 %v1919, 0.0
        %v1984 = vmax.f32 %v1920, 0.0
        %v1985 = vmax.f32 %v1921, 0.0
        %v1986 = vmax.f32 %v1922, 0.0
        %v1987 = vmax.f32 %v1923, 0.0
        %v1988 = vmax.f32 %v1924, 0.0
        %v1989 = vmax.f32 %v1925, 0.0
        %v1990 = vmax.f32 %v1926, 0.0
        %v1991 = vmax.f32 %v1927, 0.0
        %v1992 = vmax.f32 %v1928, 0.0
        %v1993 = vmax.f32 %v1929, 0.0
        %v1994 = vmax.f32 %v1930, 0.0
        %v1995 = vmax.f32 %v1931, 0.0
        %v1996 = vmax.f32 %v1932, 0.0
        %v1997 = vmax.f32 %v1933, 0.0
        %v1998 = vmax.f32 %v1934, 0.0
        %v1999 = vmax.f32 %v1935, 0.0
        %v2000 = vmax.f32 %v1936, 0.0
        %v2001 = vmax.f32 %v1937, 0.0
        %v2002 = vmax.f32 %v1938, 0.0
        %v2003 = vmax.f32 %v1939, 0.0
        %v2004 = vmax.f32 %v1940, 0.0
        %v2005 = vmax.f32 %v1941, 0.0
        %v2006 = vmax.f32 %v1942, 0.0
        %v2007 = vmax.f32 %v1943, 0.0
        %v2008 = vmax.f32 %v1944, 0.0
        %v2009 = vmax.f32 %v1945, 0.0
        %v2010 = vmax.f32 %v1946, 0.0
        %v2011 = vmax.f32 %v1947, 0.0
        %v2012 = vmax.f32 %v1948, 0.0
        %v2013 = vmax.f32 %v1949, 0.0
        %v2014 = vmax.f32 %v1950, 0.0
        %v2015 = vmax.f32 %v1951, 0.0
        %v2016 = vmax.f32 %v1952, 0.0
        %v2017 = vmax.f32 %v1953, 0.0
        %v2018 = vmax.f32 %v1954, 0.0
        %v2019 = vmax.f32 %v1955, 0.0
        %v2020 = vmax.f32 %v1956, 0.0
        %v2021 = vpack.c.bf16 %v1958, %v1957
        %v2022 = vpack.c.bf16 %v1960, %v1959
        %v2023 = vpack.c.bf16 %v1962, %v1961
        %v2024 = vpack.c.bf16 %v1964, %v1963
        %v2025 = vpack.c.bf16 %v1966, %v1965
        %v2026 = vpack.c.bf16 %v1968, %v1967
        %v2027 = vpack.c.bf16 %v1970, %v1969
        %v2028 = vpack.c.bf16 %v1972, %v1971
        %v2029 = vpack.c.bf16 %v1974, %v1973
        %v2030 = vpack.c.bf16 %v1976, %v1975
        %v2031 = vpack.c.bf16 %v1978, %v1977
        %v2032 = vpack.c.bf16 %v1980, %v1979
        %v2033 = vpack.c.bf16 %v1982, %v1981
        %v2034 = vpack.c.bf16 %v1984, %v1983
        %v2035 = vpack.c.bf16 %v1986, %v1985
        %v2036 = vpack.c.bf16 %v1988, %v1987
        %v2037 = vpack.c.bf16 %v1990, %v1989
        %v2038 = vpack.c.bf16 %v1992, %v1991
        %v2039 = vpack.c.bf16 %v1994, %v1993
        %v2040 = vpack.c.bf16 %v1996, %v1995
        %v2041 = vpack.c.bf16 %v1998, %v1997
        %v2042 = vpack.c.bf16 %v2000, %v1999
        %v2043 = vpack.c.bf16 %v2002, %v2001
        %v2044 = vpack.c.bf16 %v2004, %v2003
        %v2045 = vpack.c.bf16 %v2006, %v2005
        %v2046 = vpack.c.bf16 %v2008, %v2007
        %v2047 = vpack.c.bf16 %v2010, %v2009
        %v2048 = vpack.c.bf16 %v2012, %v2011
        %v2049 = vpack.c.bf16 %v2014, %v2013
        %v2050 = vpack.c.bf16 %v2016, %v2015
        %v2051 = vpack.c.bf16 %v2018, %v2017
        %v2052 = vpack.c.bf16 %v2020, %v2019
        %2053 = vst [vmem:[%s162] sm:$0xff] %v2021
        %2054 = vst [vmem:[%s162 + $0x8] sm:$0xff] %v2022
        %2055 = vst [vmem:[%s162 + $0x10] sm:$0xff] %v2023
        %2056 = vst [vmem:[%s162 + $0x18] sm:$0xff] %v2024
        %2057 = vst [vmem:[%s162 + $0x20] sm:$0xff] %v2025
        %2058 = vst [vmem:[%s162 + $0x28] sm:$0xff] %v2026
        %2059 = vst [vmem:[%s162 + $0x30] sm:$0xff] %v2027
        %2060 = vst [vmem:[%s162 + $0x38] sm:$0xff] %v2028
        %2061 = vst [vmem:[%s162 + $0x40] sm:$0xff] %v2029
        %2062 = vst [vmem:[%s162 + $0x48] sm:$0xff] %v2030
        %2063 = vst [vmem:[%s162 + $0x50] sm:$0xff] %v2031
        %2064 = vst [vmem:[%s162 + $0x58] sm:$0xff] %v2032
        %2065 = vst [vmem:[%s162 + $0x60] sm:$0xff] %v2033
        %2066 = vst [vmem:[%s162 + $0x68] sm:$0xff] %v2034
        %2067 = vst [vmem:[%s162 + $0x70] sm:$0xff] %v2035
        %2068 = vst [vmem:[%s162 + $0x78] sm:$0xff] %v2036
        %2069 = vst [vmem:[%s162 + $0x80] sm:$0xff] %v2037
        %2070 = vst [vmem:[%s162 + $0x88] sm:$0xff] %v2038
        %2071 = vst [vmem:[%s162 + $0x90] sm:$0xff] %v2039
        %2072 = vst [vmem:[%s162 + $0x98] sm:$0xff] %v2040
        %2073 = vst [vmem:[%s162 + $0xa0] sm:$0xff] %v2041
        %2074 = vst [vmem:[%s162 + $0xa8] sm:$0xff] %v2042
        %2075 = vst [vmem:[%s162 + $0xb0] sm:$0xff] %v2043
        %2076 = vst [vmem:[%s162 + $0xb8] sm:$0xff] %v2044
        %2077 = vst [vmem:[%s162 + $0xc0] sm:$0xff] %v2045
        %2078 = vst [vmem:[%s162 + $0xc8] sm:$0xff] %v2046
        %2079 = vst [vmem:[%s162 + $0xd0] sm:$0xff] %v2047
        %2080 = vst [vmem:[%s162 + $0xd8] sm:$0xff] %v2048
        %2081 = vst [vmem:[%s162 + $0xe0] sm:$0xff] %v2049
        %2082 = vst [vmem:[%s162 + $0xe8] sm:$0xff] %v2050
        %2083 = vst [vmem:[%s162 + $0xf0] sm:$0xff] %v2051
        %2084 = vst [vmem:[%s162 + $0xf8] sm:$0xff] %v2052
        %s2085 = sand.u32 %s93, 1
        %s2086 = scalar_lea.sflag [#allocation3], %s2085
        %s2087 = sand.u32 %s93, 1
        %s2088 = smul.addr %s2087, 256
        %s2089 = scalar_lea.vmem [#allocation2], %s2088
        // Predicated region
        $region33: #{tpu_custom_call.1} parent=31 // pred_check
          %p2090 = pneg %p103
        $region34: #{tpu_custom_call.1} parent=31 // pred_check_branch
          %2092 = sbr.rel (%p2090) target = $region36
        $region35: #{tpu_custom_call.1} parent=31 // pred_region
          %s2093 = smul.u32 8, %s17
          %2095 = vsyncadd %s2086, 0
          %s2096 = smul.addr %s2093, 4
          %s2097 = scalar_lea.hbm %s3, %s2096
          %s2098 = sshll.u32 %s2089, 4
          %s2099 = int_to_ptr.vmem [resolvable:$true] %s2098
          %s2100 = sshll.u32 %s2097, 4
          %s2101 = int_to_ptr.hbm [resolvable:$true] %s2100
          %2106 = dma.vmem_to_hbm [thread:$0]  %s2099, 4096, %s2101, %s2086, 512, 1024, 32
        $region36: #{tpu_custom_call.1} parent=31 // pred_fallthru
          _
      $region32: #{tpu_custom_call.1} parent=5 // pred_fallthru
        _
      %p2107 = scmp.le.s32.totalorder 2, %s12
      // Predicated region
      $region37: #{tpu_custom_call.1} parent=5 // pred_check
        %p2108 = pneg %p2107
      $region38: #{tpu_custom_call.1} parent=5 // pred_check_branch
        %2110 = sbr.rel (%p2108) target = $region40
      $region39: #{tpu_custom_call.1} parent=5 // pred_region
        %s2111 = ssub.s32 %s12, 2
        // Predicated region
        $region41: #{tpu_custom_call.1} parent=39 // pred_check
          %p2112 = pneg %p109
        $region42: #{tpu_custom_call.1} parent=39 // pred_check_branch
          %2114 = sbr.rel (%p2112) target = $region44
        $region43: #{tpu_custom_call.1} parent=39 // pred_region
          %s2115 = sand.u32 %s94, 1
          %s2116 = scalar_lea.sflag [#allocation3], %s2115
          %s2117 = sand.u32 %s94, 1
          %s2118 = smul.addr %s2117, 256
          %s2119 = scalar_lea.vmem [#allocation2], %s2118
          %2121 = dma.done %s2116, 4096
        $region44: #{tpu_custom_call.1} parent=39 // pred_fallthru
          _
      $region40: #{tpu_custom_call.1} parent=5 // pred_fallthru
        _
    $region6: #{tpu_custom_call.1} parent=1 // loop_footer
      %s16 = sadd.s32 1, %s12
    $region7: #{tpu_custom_call.1} parent=1 // loop_footer_branch
      %11 = sbr.rel target = $region3
    $region8: #{tpu_custom_call.1} parent=1 // loop_exit
      _
    %2122 = vsyncpa [#allocation3], 1
    %s2123 = scalar_lea.sflag [#allocation3], 1
    %2124 = vsyncpa %s2123, 1

</llo_original>
